<compile_context>
chip_gen: v6e
topology: v6e:2x2x1
jax: 0.10.0
libtpu: 0.0.40
codegen_flags: <defaults>
</compile_context>

<pallas_src>
import jax
import jax.numpy as jnp
from jax.experimental import pallas as pl
from jax.experimental.pallas import tpu as pltpu

# Layer widths of the autoencoder (enc1..enc5, dec1..dec5).
LAYER_DIMS = [784, 256, 128, 64, 32, 16, 32, 64, 128, 256, 784]
NUM_LAYERS = len(LAYER_DIMS) - 1  # 10
IN_DIM = LAYER_DIMS[0]
OUT_DIM = LAYER_DIMS[-1]


def sparse_ae_kernel(x_ref, *refs):
    """Fused 10x (Linear + ReLU).

    bf16 matmul operands (MXU-native) with f32 accumulation; bias + ReLU in f32;
    activations carried between layers in bf16; final layer stored as out dtype.
    """
    out_ref = refs[-1]
    param_refs = refs[:-1]                   # w0, b0, w1, b1, ..., w9, b9
    h = x_ref[...].astype(jnp.bfloat16)      # [tb, 784] bf16
    for i in range(NUM_LAYERS):
        w = param_refs[2 * i][...]           # bf16 [in_i, out_i]
        b = param_refs[2 * i + 1][...]       # f32  [1, out_i]
        acc = jnp.dot(h, w, preferred_element_type=jnp.float32)
        a = jnp.maximum(acc + b, 0.0)        # bias + ReLU in f32
        if i < NUM_LAYERS - 1:
            h = a.astype(jnp.bfloat16)       # carry activation in bf16
        else:
            out_ref[...] = a.astype(out_ref.dtype)


def init_params(key):
    """PyTorch nn.Linear-style init (U(-1/sqrt(in), 1/sqrt(in))), stored as
    [in_features, out_features] (transposed w.r.t. PyTorch) so the kernel does x @ W."""
    params = []
    for i in range(NUM_LAYERS):
        fan_in, fan_out = LAYER_DIMS[i], LAYER_DIMS[i + 1]
        key, kw, kb = jax.random.split(key, 3)
        bound = 1.0 / (fan_in ** 0.5)
        w = jax.random.uniform(kw, (fan_in, fan_out), jnp.float32, -bound, bound)
        b = jax.random.uniform(kb, (1, fan_out), jnp.float32, -bound, bound)
        params.append((w, b))
    return params


def _pack_params(params):
    """Cast weights to bf16 (MXU operand dtype). No feature padding."""
    return [(w.astype(jnp.bfloat16), b.astype(jnp.float32)) for (w, b) in params]


def sparse_autoencoder(x, params, *, tb=512, out_dtype=None):
    """x: [B, 784] (f32 or bf16) -> [B, 784] (out_dtype, defaults to x.dtype)."""
    B, D = x.shape
    assert D == IN_DIM
    out_dtype = x.dtype if out_dtype is None else out_dtype

    # Batch tile: full batch for small B (single block == full dim is always
    # legal), otherwise a multiple of 8. When B > tb the grid length is >= 2,
    # so the "parallel" batch axis actually shards across both v7x TensorCores.
    if B <= tb:
        tb = B
    else:
        tb = max(8, (tb // 8) * 8)
    grid = (pl.cdiv(B, tb),)

    packed = _pack_params(params)
    flat_params = []
    in_specs = [pl.BlockSpec((tb, IN_DIM), lambda i: (i, 0))]
    for w, b in packed:
        flat_params += [w, b]
        # Constant block index -> weights/biases stay VMEM-resident across steps.
        in_specs.append(pl.BlockSpec(w.shape, lambda i: (0, 0)))
        in_specs.append(pl.BlockSpec(b.shape, lambda i: (0, 0)))

    # Real (unpadded) traffic for the scheduler hint.
    param_bytes = sum(w.size * w.dtype.itemsize + b.size * b.dtype.itemsize
                      for w, b in packed)
    flops = 2 * B * sum(LAYER_DIMS[i] * LAYER_DIMS[i + 1] for i in range(NUM_LAYERS))
    bytes_accessed = (B * IN_DIM * x.dtype.itemsize
                      + B * OUT_DIM * jnp.dtype(out_dtype).itemsize
                      + param_bytes)

    # VMEM budget for this tile: double-buffered in/out blocks + (double-buffered)
    # params + bf16 activation scratch + headroom. Floor at 32 MiB (raises v5e's
    # 16 MiB default when needed), cap at 48 MiB (fits v7x's 64 MiB/TC).
    needed = (2 * tb * IN_DIM * x.dtype.itemsize
              + 2 * tb * OUT_DIM * jnp.dtype(out_dtype).itemsize
              + 2 * param_bytes
              + 3 * tb * IN_DIM * 2
              + (4 << 20))
    vmem_limit = int(min(48 << 20, max(32 << 20, needed)))

    out = pl.pallas_call(
        sparse_ae_kernel,
        out_shape=jax.ShapeDtypeStruct((B, OUT_DIM), out_dtype),
        grid=grid,
        in_specs=in_specs,
        out_specs=pl.BlockSpec((tb, OUT_DIM), lambda i: (i, 0)),
        compiler_params=pltpu.CompilerParams(
            dimension_semantics=("parallel",),
            vmem_limit_bytes=vmem_limit),
        cost_estimate=pl.CostEstimate(flops=flops, transcendentals=0,
                                      bytes_accessed=bytes_accessed),
    )(x, *flat_params)

    return out


def reference_forward(x, params):
    """Pure-JAX reference with the same bf16-operand / f32-accumulate numerics."""
    h = x.astype(jnp.bfloat16)
    for i, (w, b) in enumerate(params):
        acc = jnp.dot(h, w.astype(jnp.bfloat16), preferred_element_type=jnp.float32)
        a = jnp.maximum(acc + b, 0.0)
        h = a.astype(jnp.bfloat16) if i < len(params) - 1 else a
    return h


if __name__ == "__main__":
    key = jax.random.PRNGKey(0)
    key, kx = jax.random.split(key)

    # Small deterministic example (use B >= 1024 with the default tb=512 for
    # real throughput). tb=16 here exercises a multi-step grid with
    # VMEM-resident weights.
    B = 32
    x = jax.random.normal(kx, (B, IN_DIM), dtype=jnp.float32)
    params = init_params(key)

    out = jax.block_until_ready(sparse_autoencoder(x, params, tb=16))
    ref = jax.block_until_ready(reference_forward(x, params))

    assert out.shape == (B, OUT_DIM)
    assert out.dtype == x.dtype
    err = float(jnp.max(jnp.abs(out - ref)))
    assert jnp.allclose(out, ref, atol=2e-2, rtol=2e-2), err

    print("KERNEL_OK")
</pallas_src>

<mosaic_0001>
module attributes {stable_mosaic.version = 11 : i64} {
  func.func @sparse_ae_kernel(%arg0: i32, %arg1: memref<16x784xf32, #tpu.memory_space<vmem>>, %arg2: memref<784x256xbf16, #tpu.memory_space<vmem>>, %arg3: memref<1x256xf32, #tpu.memory_space<vmem>>, %arg4: memref<256x128xbf16, #tpu.memory_space<vmem>>, %arg5: memref<1x128xf32, #tpu.memory_space<vmem>>, %arg6: memref<128x64xbf16, #tpu.memory_space<vmem>>, %arg7: memref<1x64xf32, #tpu.memory_space<vmem>>, %arg8: memref<64x32xbf16, #tpu.memory_space<vmem>>, %arg9: memref<1x32xf32, #tpu.memory_space<vmem>>, %arg10: memref<32x16xbf16, #tpu.memory_space<vmem>>, %arg11: memref<1x16xf32, #tpu.memory_space<vmem>>, %arg12: memref<16x32xbf16, #tpu.memory_space<vmem>>, %arg13: memref<1x32xf32, #tpu.memory_space<vmem>>, %arg14: memref<32x64xbf16, #tpu.memory_space<vmem>>, %arg15: memref<1x64xf32, #tpu.memory_space<vmem>>, %arg16: memref<64x128xbf16, #tpu.memory_space<vmem>>, %arg17: memref<1x128xf32, #tpu.memory_space<vmem>>, %arg18: memref<128x256xbf16, #tpu.memory_space<vmem>>, %arg19: memref<1x256xf32, #tpu.memory_space<vmem>>, %arg20: memref<256x784xbf16, #tpu.memory_space<vmem>>, %arg21: memref<1x784xf32, #tpu.memory_space<vmem>>, %arg22: memref<16x784xf32, #tpu.memory_space<vmem>>) attributes {dimension_semantics = [#tpu.dimension_semantics<parallel>], iteration_bounds = array<i64: 2>, scalar_prefetch = 0 : i64, scratch_operands = 0 : i64, tpu.core_type = #tpu.core_type<tc>, window_params = [{transform_indices = @transform_0, window_bounds = array<i64: 16, 784>}, {pipeline_mode = #tpu.pipeline_mode<synchronous>, transform_indices = @transform_1, window_bounds = array<i64: 784, 256>}, {pipeline_mode = #tpu.pipeline_mode<synchronous>, transform_indices = @transform_2, window_bounds = array<i64: 1, 256>}, {pipeline_mode = #tpu.pipeline_mode<synchronous>, transform_indices = @transform_3, window_bounds = array<i64: 256, 128>}, {pipeline_mode = #tpu.pipeline_mode<synchronous>, transform_indices = @transform_4, window_bounds = array<i64: 1, 128>}, {pipeline_mode = #tpu.pipeline_mode<synchronous>, transform_indices = @transform_5, window_bounds = array<i64: 128, 64>}, {pipeline_mode = #tpu.pipeline_mode<synchronous>, transform_indices = @transform_6, window_bounds = array<i64: 1, 64>}, {pipeline_mode = #tpu.pipeline_mode<synchronous>, transform_indices = @transform_7, window_bounds = array<i64: 64, 32>}, {pipeline_mode = #tpu.pipeline_mode<synchronous>, transform_indices = @transform_8, window_bounds = array<i64: 1, 32>}, {pipeline_mode = #tpu.pipeline_mode<synchronous>, transform_indices = @transform_9, window_bounds = array<i64: 32, 16>}, {pipeline_mode = #tpu.pipeline_mode<synchronous>, transform_indices = @transform_10, window_bounds = array<i64: 1, 16>}, {pipeline_mode = #tpu.pipeline_mode<synchronous>, transform_indices = @transform_11, window_bounds = array<i64: 16, 32>}, {pipeline_mode = #tpu.pipeline_mode<synchronous>, transform_indices = @transform_12, window_bounds = array<i64: 1, 32>}, {pipeline_mode = #tpu.pipeline_mode<synchronous>, transform_indices = @transform_13, window_bounds = array<i64: 32, 64>}, {pipeline_mode = #tpu.pipeline_mode<synchronous>, transform_indices = @transform_14, window_bounds = array<i64: 1, 64>}, {pipeline_mode = #tpu.pipeline_mode<synchronous>, transform_indices = @transform_15, window_bounds = array<i64: 64, 128>}, {pipeline_mode = #tpu.pipeline_mode<synchronous>, transform_indices = @transform_16, window_bounds = array<i64: 1, 128>}, {pipeline_mode = #tpu.pipeline_mode<synchronous>, transform_indices = @transform_17, window_bounds = array<i64: 128, 256>}, {pipeline_mode = #tpu.pipeline_mode<synchronous>, transform_indices = @transform_18, window_bounds = array<i64: 1, 256>}, {pipeline_mode = #tpu.pipeline_mode<synchronous>, transform_indices = @transform_19, window_bounds = array<i64: 256, 784>}, {pipeline_mode = #tpu.pipeline_mode<synchronous>, transform_indices = @transform_20, window_bounds = array<i64: 1, 784>}, {transform_indices = @transform_21, window_bounds = array<i64: 16, 784>}]} {
    %c0 = arith.constant 0 : index
    %c0_0 = arith.constant 0 : index
    %0 = vector.load %arg1[%c0, %c0_0] : memref<16x784xf32, #tpu.memory_space<vmem>>, vector<16x784xf32>
    %1 = arith.truncf %0 : vector<16x784xf32> to vector<16x784xbf16>
    %c0_1 = arith.constant 0 : index
    %c0_2 = arith.constant 0 : index
    %2 = vector.load %arg2[%c0_1, %c0_2] : memref<784x256xbf16, #tpu.memory_space<vmem>>, vector<784x256xbf16>
    %c0_3 = arith.constant 0 : index
    %c0_4 = arith.constant 0 : index
    %3 = vector.load %arg3[%c0_3, %c0_4] : memref<1x256xf32, #tpu.memory_space<vmem>>, vector<1x256xf32>
    %cst = arith.constant dense<0.000000e+00> : vector<16x256xf32>
    %4 = tpu.matmul %1, %2, %cst {dimension_numbers = #tpu.dot_dimension_numbers<[1], [0], [0], [1], [0, 0, 1, 1], [], []>} : vector<16x784xbf16>, vector<784x256xbf16>, vector<16x256xf32> -> vector<16x256xf32>
    %5 = vector.broadcast %3 : vector<1x256xf32> to vector<16x256xf32>
    %6 = arith.addf %4, %5 : vector<16x256xf32>
    %cst_5 = arith.constant 0.000000e+00 : f32
    %7 = vector.broadcast %cst_5 : f32 to vector<16x256xf32>
    %8 = arith.maximumf %6, %7 : vector<16x256xf32>
    %9 = arith.truncf %8 : vector<16x256xf32> to vector<16x256xbf16>
    %c0_6 = arith.constant 0 : index
    %c0_7 = arith.constant 0 : index
    %10 = vector.load %arg4[%c0_6, %c0_7] : memref<256x128xbf16, #tpu.memory_space<vmem>>, vector<256x128xbf16>
    %c0_8 = arith.constant 0 : index
    %c0_9 = arith.constant 0 : index
    %11 = vector.load %arg5[%c0_8, %c0_9] : memref<1x128xf32, #tpu.memory_space<vmem>>, vector<1x128xf32>
    %cst_10 = arith.constant dense<0.000000e+00> : vector<16x128xf32>
    %12 = tpu.matmul %9, %10, %cst_10 {dimension_numbers = #tpu.dot_dimension_numbers<[1], [0], [0], [1], [0, 0, 1, 1], [], []>} : vector<16x256xbf16>, vector<256x128xbf16>, vector<16x128xf32> -> vector<16x128xf32>
    %13 = vector.broadcast %11 : vector<1x128xf32> to vector<16x128xf32>
    %14 = arith.addf %12, %13 : vector<16x128xf32>
    %cst_11 = arith.constant 0.000000e+00 : f32
    %15 = vector.broadcast %cst_11 : f32 to vector<16x128xf32>
    %16 = arith.maximumf %14, %15 : vector<16x128xf32>
    %17 = arith.truncf %16 : vector<16x128xf32> to vector<16x128xbf16>
    %c0_12 = arith.constant 0 : index
    %c0_13 = arith.constant 0 : index
    %18 = vector.load %arg6[%c0_12, %c0_13] : memref<128x64xbf16, #tpu.memory_space<vmem>>, vector<128x64xbf16>
    %c0_14 = arith.constant 0 : index
    %c0_15 = arith.constant 0 : index
    %19 = vector.load %arg7[%c0_14, %c0_15] : memref<1x64xf32, #tpu.memory_space<vmem>>, vector<1x64xf32>
    %cst_16 = arith.constant dense<0.000000e+00> : vector<16x64xf32>
    %20 = tpu.matmul %17, %18, %cst_16 {dimension_numbers = #tpu.dot_dimension_numbers<[1], [0], [0], [1], [0, 0, 1, 1], [], []>} : vector<16x128xbf16>, vector<128x64xbf16>, vector<16x64xf32> -> vector<16x64xf32>
    %21 = vector.broadcast %19 : vector<1x64xf32> to vector<16x64xf32>
    %22 = arith.addf %20, %21 : vector<16x64xf32>
    %cst_17 = arith.constant 0.000000e+00 : f32
    %23 = vector.broadcast %cst_17 : f32 to vector<16x64xf32>
    %24 = arith.maximumf %22, %23 : vector<16x64xf32>
    %25 = arith.truncf %24 : vector<16x64xf32> to vector<16x64xbf16>
    %c0_18 = arith.constant 0 : index
    %c0_19 = arith.constant 0 : index
    %26 = vector.load %arg8[%c0_18, %c0_19] : memref<64x32xbf16, #tpu.memory_space<vmem>>, vector<64x32xbf16>
    %c0_20 = arith.constant 0 : index
    %c0_21 = arith.constant 0 : index
    %27 = vector.load %arg9[%c0_20, %c0_21] : memref<1x32xf32, #tpu.memory_space<vmem>>, vector<1x32xf32>
    %cst_22 = arith.constant dense<0.000000e+00> : vector<16x32xf32>
    %28 = tpu.matmul %25, %26, %cst_22 {dimension_numbers = #tpu.dot_dimension_numbers<[1], [0], [0], [1], [0, 0, 1, 1], [], []>} : vector<16x64xbf16>, vector<64x32xbf16>, vector<16x32xf32> -> vector<16x32xf32>
    %29 = vector.broadcast %27 : vector<1x32xf32> to vector<16x32xf32>
    %30 = arith.addf %28, %29 : vector<16x32xf32>
    %cst_23 = arith.constant 0.000000e+00 : f32
    %31 = vector.broadcast %cst_23 : f32 to vector<16x32xf32>
    %32 = arith.maximumf %30, %31 : vector<16x32xf32>
    %33 = arith.truncf %32 : vector<16x32xf32> to vector<16x32xbf16>
    %c0_24 = arith.constant 0 : index
    %c0_25 = arith.constant 0 : index
    %34 = vector.load %arg10[%c0_24, %c0_25] : memref<32x16xbf16, #tpu.memory_space<vmem>>, vector<32x16xbf16>
    %c0_26 = arith.constant 0 : index
    %c0_27 = arith.constant 0 : index
    %35 = vector.load %arg11[%c0_26, %c0_27] : memref<1x16xf32, #tpu.memory_space<vmem>>, vector<1x16xf32>
    %cst_28 = arith.constant dense<0.000000e+00> : vector<16x16xf32>
    %36 = tpu.matmul %33, %34, %cst_28 {dimension_numbers = #tpu.dot_dimension_numbers<[1], [0], [0], [1], [0, 0, 1, 1], [], []>} : vector<16x32xbf16>, vector<32x16xbf16>, vector<16x16xf32> -> vector<16x16xf32>
    %37 = vector.broadcast %35 : vector<1x16xf32> to vector<16x16xf32>
    %38 = arith.addf %36, %37 : vector<16x16xf32>
    %cst_29 = arith.constant 0.000000e+00 : f32
    %39 = vector.broadcast %cst_29 : f32 to vector<16x16xf32>
    %40 = arith.maximumf %38, %39 : vector<16x16xf32>
    %41 = arith.truncf %40 : vector<16x16xf32> to vector<16x16xbf16>
    %c0_30 = arith.constant 0 : index
    %c0_31 = arith.constant 0 : index
    %42 = vector.load %arg12[%c0_30, %c0_31] : memref<16x32xbf16, #tpu.memory_space<vmem>>, vector<16x32xbf16>
    %c0_32 = arith.constant 0 : index
    %c0_33 = arith.constant 0 : index
    %43 = vector.load %arg13[%c0_32, %c0_33] : memref<1x32xf32, #tpu.memory_space<vmem>>, vector<1x32xf32>
    %cst_34 = arith.constant dense<0.000000e+00> : vector<16x32xf32>
    %44 = tpu.matmul %41, %42, %cst_34 {dimension_numbers = #tpu.dot_dimension_numbers<[1], [0], [0], [1], [0, 0, 1, 1], [], []>} : vector<16x16xbf16>, vector<16x32xbf16>, vector<16x32xf32> -> vector<16x32xf32>
    %45 = vector.broadcast %43 : vector<1x32xf32> to vector<16x32xf32>
    %46 = arith.addf %44, %45 : vector<16x32xf32>
    %cst_35 = arith.constant 0.000000e+00 : f32
    %47 = vector.broadcast %cst_35 : f32 to vector<16x32xf32>
    %48 = arith.maximumf %46, %47 : vector<16x32xf32>
    %49 = arith.truncf %48 : vector<16x32xf32> to vector<16x32xbf16>
    %c0_36 = arith.constant 0 : index
    %c0_37 = arith.constant 0 : index
    %50 = vector.load %arg14[%c0_36, %c0_37] : memref<32x64xbf16, #tpu.memory_space<vmem>>, vector<32x64xbf16>
    %c0_38 = arith.constant 0 : index
    %c0_39 = arith.constant 0 : index
    %51 = vector.load %arg15[%c0_38, %c0_39] : memref<1x64xf32, #tpu.memory_space<vmem>>, vector<1x64xf32>
    %cst_40 = arith.constant dense<0.000000e+00> : vector<16x64xf32>
    %52 = tpu.matmul %49, %50, %cst_40 {dimension_numbers = #tpu.dot_dimension_numbers<[1], [0], [0], [1], [0, 0, 1, 1], [], []>} : vector<16x32xbf16>, vector<32x64xbf16>, vector<16x64xf32> -> vector<16x64xf32>
    %53 = vector.broadcast %51 : vector<1x64xf32> to vector<16x64xf32>
    %54 = arith.addf %52, %53 : vector<16x64xf32>
    %cst_41 = arith.constant 0.000000e+00 : f32
    %55 = vector.broadcast %cst_41 : f32 to vector<16x64xf32>
    %56 = arith.maximumf %54, %55 : vector<16x64xf32>
    %57 = arith.truncf %56 : vector<16x64xf32> to vector<16x64xbf16>
    %c0_42 = arith.constant 0 : index
    %c0_43 = arith.constant 0 : index
    %58 = vector.load %arg16[%c0_42, %c0_43] : memref<64x128xbf16, #tpu.memory_space<vmem>>, vector<64x128xbf16>
    %c0_44 = arith.constant 0 : index
    %c0_45 = arith.constant 0 : index
    %59 = vector.load %arg17[%c0_44, %c0_45] : memref<1x128xf32, #tpu.memory_space<vmem>>, vector<1x128xf32>
    %cst_46 = arith.constant dense<0.000000e+00> : vector<16x128xf32>
    %60 = tpu.matmul %57, %58, %cst_46 {dimension_numbers = #tpu.dot_dimension_numbers<[1], [0], [0], [1], [0, 0, 1, 1], [], []>} : vector<16x64xbf16>, vector<64x128xbf16>, vector<16x128xf32> -> vector<16x128xf32>
    %61 = vector.broadcast %59 : vector<1x128xf32> to vector<16x128xf32>
    %62 = arith.addf %60, %61 : vector<16x128xf32>
    %cst_47 = arith.constant 0.000000e+00 : f32
    %63 = vector.broadcast %cst_47 : f32 to vector<16x128xf32>
    %64 = arith.maximumf %62, %63 : vector<16x128xf32>
    %65 = arith.truncf %64 : vector<16x128xf32> to vector<16x128xbf16>
    %c0_48 = arith.constant 0 : index
    %c0_49 = arith.constant 0 : index
    %66 = vector.load %arg18[%c0_48, %c0_49] : memref<128x256xbf16, #tpu.memory_space<vmem>>, vector<128x256xbf16>
    %c0_50 = arith.constant 0 : index
    %c0_51 = arith.constant 0 : index
    %67 = vector.load %arg19[%c0_50, %c0_51] : memref<1x256xf32, #tpu.memory_space<vmem>>, vector<1x256xf32>
    %cst_52 = arith.constant dense<0.000000e+00> : vector<16x256xf32>
    %68 = tpu.matmul %65, %66, %cst_52 {dimension_numbers = #tpu.dot_dimension_numbers<[1], [0], [0], [1], [0, 0, 1, 1], [], []>} : vector<16x128xbf16>, vector<128x256xbf16>, vector<16x256xf32> -> vector<16x256xf32>
    %69 = vector.broadcast %67 : vector<1x256xf32> to vector<16x256xf32>
    %70 = arith.addf %68, %69 : vector<16x256xf32>
    %cst_53 = arith.constant 0.000000e+00 : f32
    %71 = vector.broadcast %cst_53 : f32 to vector<16x256xf32>
    %72 = arith.maximumf %70, %71 : vector<16x256xf32>
    %73 = arith.truncf %72 : vector<16x256xf32> to vector<16x256xbf16>
    %c0_54 = arith.constant 0 : index
    %c0_55 = arith.constant 0 : index
    %74 = vector.load %arg20[%c0_54, %c0_55] : memref<256x784xbf16, #tpu.memory_space<vmem>>, vector<256x784xbf16>
    %c0_56 = arith.constant 0 : index
    %c0_57 = arith.constant 0 : index
    %75 = vector.load %arg21[%c0_56, %c0_57] : memref<1x784xf32, #tpu.memory_space<vmem>>, vector<1x784xf32>
    %cst_58 = arith.constant dense<0.000000e+00> : vector<16x784xf32>
    %76 = tpu.matmul %73, %74, %cst_58 {dimension_numbers = #tpu.dot_dimension_numbers<[1], [0], [0], [1], [0, 0, 1, 1], [], []>} : vector<16x256xbf16>, vector<256x784xbf16>, vector<16x784xf32> -> vector<16x784xf32>
    %77 = vector.broadcast %75 : vector<1x784xf32> to vector<16x784xf32>
    %78 = arith.addf %76, %77 : vector<16x784xf32>
    %cst_59 = arith.constant 0.000000e+00 : f32
    %79 = vector.broadcast %cst_59 : f32 to vector<16x784xf32>
    %80 = arith.maximumf %78, %79 : vector<16x784xf32>
    %c0_60 = arith.constant 0 : index
    %c0_61 = arith.constant 0 : index
    %81 = vector.load %arg22[%c0_60, %c0_61] : memref<16x784xf32, #tpu.memory_space<vmem>>, vector<16x784xf32>
    tpu.vector_store %arg22[%c0_60, %c0_61], %80 {strides = array<i32>} : memref<16x784xf32, #tpu.memory_space<vmem>>, vector<16x784xf32>,
    return
  }
  func.func @transform_0(%arg0: i32) -> (i32, i32) {
    %c0_i32 = arith.constant 0 : i32
    %c0_i32_0 = arith.constant 0 : i32
    return %arg0, %c0_i32 : i32, i32
  }
  func.func @transform_1(%arg0: i32) -> (i32, i32) {
    %c0_i32 = arith.constant 0 : i32
    %c0_i32_0 = arith.constant 0 : i32
    %c0_i32_1 = arith.constant 0 : i32
    return %c0_i32, %c0_i32_0 : i32, i32
  }
  func.func @transform_2(%arg0: i32) -> (i32, i32) {
    %c0_i32 = arith.constant 0 : i32
    %c0_i32_0 = arith.constant 0 : i32
    %c0_i32_1 = arith.constant 0 : i32
    return %c0_i32, %c0_i32_0 : i32, i32
  }
  func.func @transform_3(%arg0: i32) -> (i32, i32) {
    %c0_i32 = arith.constant 0 : i32
    %c0_i32_0 = arith.constant 0 : i32
    %c0_i32_1 = arith.constant 0 : i32
    return %c0_i32, %c0_i32_0 : i32, i32
  }
  func.func @transform_4(%arg0: i32) -> (i32, i32) {
    %c0_i32 = arith.constant 0 : i32
    %c0_i32_0 = arith.constant 0 : i32
    %c0_i32_1 = arith.constant 0 : i32
    return %c0_i32, %c0_i32_0 : i32, i32
  }
  func.func @transform_5(%arg0: i32) -> (i32, i32) {
    %c0_i32 = arith.constant 0 : i32
    %c0_i32_0 = arith.constant 0 : i32
    %c0_i32_1 = arith.constant 0 : i32
    return %c0_i32, %c0_i32_0 : i32, i32
  }
  func.func @transform_6(%arg0: i32) -> (i32, i32) {
    %c0_i32 = arith.constant 0 : i32
    %c0_i32_0 = arith.constant 0 : i32
    %c0_i32_1 = arith.constant 0 : i32
    return %c0_i32, %c0_i32_0 : i32, i32
  }
  func.func @transform_7(%arg0: i32) -> (i32, i32) {
    %c0_i32 = arith.constant 0 : i32
    %c0_i32_0 = arith.constant 0 : i32
    %c0_i32_1 = arith.constant 0 : i32
    return %c0_i32, %c0_i32_0 : i32, i32
  }
  func.func @transform_8(%arg0: i32) -> (i32, i32) {
    %c0_i32 = arith.constant 0 : i32
    %c0_i32_0 = arith.constant 0 : i32
    %c0_i32_1 = arith.constant 0 : i32
    return %c0_i32, %c0_i32_0 : i32, i32
  }
  func.func @transform_9(%arg0: i32) -> (i32, i32) {
    %c0_i32 = arith.constant 0 : i32
    %c0_i32_0 = arith.constant 0 : i32
    %c0_i32_1 = arith.constant 0 : i32
    return %c0_i32, %c0_i32_0 : i32, i32
  }
  func.func @transform_10(%arg0: i32) -> (i32, i32) {
    %c0_i32 = arith.constant 0 : i32
    %c0_i32_0 = arith.constant 0 : i32
    %c0_i32_1 = arith.constant 0 : i32
    return %c0_i32, %c0_i32_0 : i32, i32
  }
  func.func @transform_11(%arg0: i32) -> (i32, i32) {
    %c0_i32 = arith.constant 0 : i32
    %c0_i32_0 = arith.constant 0 : i32
    %c0_i32_1 = arith.constant 0 : i32
    return %c0_i32, %c0_i32_0 : i32, i32
  }
  func.func @transform_12(%arg0: i32) -> (i32, i32) {
    %c0_i32 = arith.constant 0 : i32
    %c0_i32_0 = arith.constant 0 : i32
    %c0_i32_1 = arith.constant 0 : i32
    return %c0_i32, %c0_i32_0 : i32, i32
  }
  func.func @transform_13(%arg0: i32) -> (i32, i32) {
    %c0_i32 = arith.constant 0 : i32
    %c0_i32_0 = arith.constant 0 : i32
    %c0_i32_1 = arith.constant 0 : i32
    return %c0_i32, %c0_i32_0 : i32, i32
  }
  func.func @transform_14(%arg0: i32) -> (i32, i32) {
    %c0_i32 = arith.constant 0 : i32
    %c0_i32_0 = arith.constant 0 : i32
    %c0_i32_1 = arith.constant 0 : i32
    return %c0_i32, %c0_i32_0 : i32, i32
  }
  func.func @transform_15(%arg0: i32) -> (i32, i32) {
    %c0_i32 = arith.constant 0 : i32
    %c0_i32_0 = arith.constant 0 : i32
    %c0_i32_1 = arith.constant 0 : i32
    return %c0_i32, %c0_i32_0 : i32, i32
  }
  func.func @transform_16(%arg0: i32) -> (i32, i32) {
    %c0_i32 = arith.constant 0 : i32
    %c0_i32_0 = arith.constant 0 : i32
    %c0_i32_1 = arith.constant 0 : i32
    return %c0_i32, %c0_i32_0 : i32, i32
  }
  func.func @transform_17(%arg0: i32) -> (i32, i32) {
    %c0_i32 = arith.constant 0 : i32
    %c0_i32_0 = arith.constant 0 : i32
    %c0_i32_1 = arith.constant 0 : i32
    return %c0_i32, %c0_i32_0 : i32, i32
  }
  func.func @transform_18(%arg0: i32) -> (i32, i32) {
    %c0_i32 = arith.constant 0 : i32
    %c0_i32_0 = arith.constant 0 : i32
    %c0_i32_1 = arith.constant 0 : i32
    return %c0_i32, %c0_i32_0 : i32, i32
  }
  func.func @transform_19(%arg0: i32) -> (i32, i32) {
    %c0_i32 = arith.constant 0 : i32
    %c0_i32_0 = arith.constant 0 : i32
    %c0_i32_1 = arith.constant 0 : i32
    return %c0_i32, %c0_i32_0 : i32, i32
  }
  func.func @transform_20(%arg0: i32) -> (i32, i32) {
    %c0_i32 = arith.constant 0 : i32
    %c0_i32_0 = arith.constant 0 : i32
    %c0_i32_1 = arith.constant 0 : i32
    return %c0_i32, %c0_i32_0 : i32, i32
  }
  func.func @transform_21(%arg0: i32) -> (i32, i32) {
    %c0_i32 = arith.constant 0 : i32
    %c0_i32_0 = arith.constant 0 : i32
    return %arg0, %c0_i32 : i32, i32
  }
}

</mosaic_0001>

<llo_original>
// kernel: tpu_custom_call.1
$region0: #{tpu_custom_call.1}
  #allocation0 [shape = 'u32[]', space=smem, size = 0x4, offset = 0x4, fixed_abs, tag = 'smem constant byte address 0x4 - core index']
  #allocation1 [shape = 'u32[144,128]{1,0:T(1,128)}', space=vmem, size = 0x12000, scoped, tag = 'internal scratch']
  %s0 = inlined_call_operand.vmem [shape: f32[32,784], index: 0, kind: input, shape index: {}]
  %s1 = inlined_call_operand.vmem [shape: bf16[784,256], index: 1, kind: input, shape index: {}]
  %s2 = inlined_call_operand.vmem [shape: f32[1,256], index: 2, kind: input, shape index: {}]
  %s3 = inlined_call_operand.vmem [shape: bf16[256,128], index: 3, kind: input, shape index: {}]
  %s4 = inlined_call_operand.vmem [shape: f32[1,128], index: 4, kind: input, shape index: {}]
  %s5 = inlined_call_operand.vmem [shape: bf16[128,64], index: 5, kind: input, shape index: {}]
  %s6 = inlined_call_operand.vmem [shape: f32[1,64], index: 6, kind: input, shape index: {}]
  %s7 = inlined_call_operand.vmem [shape: bf16[64,32], index: 7, kind: input, shape index: {}]
  %s8 = inlined_call_operand.vmem [shape: f32[1,32], index: 8, kind: input, shape index: {}]
  %s9 = inlined_call_operand.vmem [shape: bf16[32,16], index: 9, kind: input, shape index: {}]
  %s10 = inlined_call_operand.vmem [shape: f32[1,16], index: 10, kind: input, shape index: {}]
  %s11 = inlined_call_operand.vmem [shape: bf16[16,32], index: 11, kind: input, shape index: {}]
  %s12 = inlined_call_operand.vmem [shape: f32[1,32], index: 12, kind: input, shape index: {}]
  %s13 = inlined_call_operand.vmem [shape: bf16[32,64], index: 13, kind: input, shape index: {}]
  %s14 = inlined_call_operand.vmem [shape: f32[1,64], index: 14, kind: input, shape index: {}]
  %s15 = inlined_call_operand.vmem [shape: bf16[64,128], index: 15, kind: input, shape index: {}]
  %s16 = inlined_call_operand.vmem [shape: f32[1,128], index: 16, kind: input, shape index: {}]
  %s17 = inlined_call_operand.vmem [shape: bf16[128,256], index: 17, kind: input, shape index: {}]
  %s18 = inlined_call_operand.vmem [shape: f32[1,256], index: 18, kind: input, shape index: {}]
  %s19 = inlined_call_operand.vmem [shape: bf16[256,784], index: 19, kind: input, shape index: {}]
  %s20 = inlined_call_operand.vmem [shape: f32[1,784], index: 20, kind: input, shape index: {}]
  %s21 = inlined_call_operand.hbm [shape: f32[32,784], index: 21, kind: output, shape index: {}]
  %s22 = sld [smem:[#allocation0]]
  $region117: #{tpu_custom_call.1} parent=0
    _
  %s24 = ssub.s32 1, %s22
  %s25 = scalar_select 0, %s24, %s22
  $region1: #{tpu_custom_call.1} parent=0
    #allocation2 [shape = 'u8[114688]{0}', space=vmem, size = 0x1c000, scoped, tag = 'output window, operand 0']
    #allocation3 [shape = 's32[2]{0}', space=sflag, size = 0x8, scoped, tag = 'scoped memory for tpu_custom_call.1']
    %26 = vsyncpa [#allocation3], 0
    %s27 = scalar_lea.sflag [#allocation3], 1
    %28 = vsyncpa %s27, 0
    loop: start=0, step=1, limit=4
    $region2: #{tpu_custom_call.1} parent=1 // loop_pre_header
      _
    $region3: #{tpu_custom_call.1} parent=1 // loop_header
      %s30 = sphi 0, %s34
      %p31 = scmp.ge.s32.totalorder %s30, 4
      %s40 = sphi 0, %s42
      %s43 = sphi 0, %s40
      %s44 = sphi 0, %s43
      %s60 = sphi 0, %s44
      %s64 = sphi 0, %s64
      %s66 = sphi 0, %s64
      %s67 = sphi 0, %s66
      %s81 = sphi 0, %s67
      %s85 = sphi 0, %s85
      %s87 = sphi 0, %s85
      %s88 = sphi 0, %s87
      %s102 = sphi 0, %s88
      %s106 = sphi 0, %s106
      %s108 = sphi 0, %s106
      %s109 = sphi 0, %s108
      %s123 = sphi 0, %s109
      %s127 = sphi 0, %s127
      %s129 = sphi 0, %s127
      %s130 = sphi 0, %s129
      %s144 = sphi 0, %s130
      %s148 = sphi 0, %s148
      %s150 = sphi 0, %s148
      %s151 = sphi 0, %s150
      %s165 = sphi 0, %s151
      %s169 = sphi 0, %s169
      %s171 = sphi 0, %s169
      %s172 = sphi 0, %s171
      %s186 = sphi 0, %s172
      %s190 = sphi 0, %s190
      %s192 = sphi 0, %s190
      %s193 = sphi 0, %s192
      %s207 = sphi 0, %s193
      %s211 = sphi 0, %s211
      %s213 = sphi 0, %s211
      %s214 = sphi 0, %s213
      %s228 = sphi 0, %s214
      %s232 = sphi 0, %s232
      %s234 = sphi 0, %s232
      %s235 = sphi 0, %s234
      %s249 = sphi 0, %s235
      %s253 = sphi 0, %s253
      %s255 = sphi 0, %s253
      %s256 = sphi 0, %s255
      %s270 = sphi 0, %s256
      %s274 = sphi 0, %s274
      %s276 = sphi 0, %s274
      %s277 = sphi 0, %s276
      %s291 = sphi 0, %s277
      %s295 = sphi 0, %s295
      %s297 = sphi 0, %s295
      %s298 = sphi 0, %s297
      %s312 = sphi 0, %s298
      %s316 = sphi 0, %s316
      %s318 = sphi 0, %s316
      %s319 = sphi 0, %s318
      %s333 = sphi 0, %s319
      %s337 = sphi 0, %s337
      %s339 = sphi 0, %s337
      %s340 = sphi 0, %s339
      %s354 = sphi 0, %s340
      %s358 = sphi 0, %s358
      %s360 = sphi 0, %s358
      %s361 = sphi 0, %s360
      %s375 = sphi 0, %s361
      %s379 = sphi 0, %s379
      %s381 = sphi 0, %s379
      %s382 = sphi 0, %s381
      %s396 = sphi 0, %s382
      %s400 = sphi 0, %s400
      %s402 = sphi 0, %s400
      %s403 = sphi 0, %s402
      %s417 = sphi 0, %s403
      %s421 = sphi 0, %s421
      %s423 = sphi 0, %s421
      %s424 = sphi 0, %s423
      %s438 = sphi 0, %s424
      %s442 = sphi 0, %s442
      %s444 = sphi 0, %s442
      %s445 = sphi 0, %s444
      %s459 = sphi 0, %s445
      %s463 = sphi 0, %s463
      %s465 = sphi 0, %s463
      %s466 = sphi 0, %s465
      %s480 = sphi 0, %s466
      %s486 = sphi 0, %s488
      %s489 = sphi 0, %s486
      %s490 = sphi 0, %s489
      %s506 = sphi 0, %s490
    $region4: #{tpu_custom_call.1} parent=1 // loop_header_branch
      %33 = sbr.rel (%p31) target = $region8
    $region5: #{tpu_custom_call.1} parent=1 // loop_body
      %s35 = ssub.s32 %s30, 1
      %s36 = ssub.s32 %s30, 2
      %s37 = sadd.s32 %s30, 1
      %s38 = ssub.s32 %s30, %s37
      %p39 = scmp.eq.s32.totalorder %s38, 0
      %s41 = sadd.s32 %s40, 1
      %s42 = scalar_select %p39, %s40, %s41
      %p45 = pneg %p39
      %p46 = scmp.eq.s32.totalorder %s30, 1
      %p47 = por %p45, %p46
      %p48 = scmp.ne.s32.totalorder %s40, %s43
      %p49 = scmp.eq.s32.totalorder %s30, 0
      %p50 = por %p48, %p49
      %p51 = scmp.ne.s32.totalorder %s40, %s43
      %p52 = scmp.eq.s32.totalorder %s35, 1
      %p53 = por %p51, %p52
      %p54 = scmp.ne.s32.totalorder %s43, %s44
      %p55 = scmp.eq.s32.totalorder %s35, 0
      %p56 = por %p54, %p55
      %p57 = scmp.ne.s32.totalorder %s43, %s44
      %p58 = scmp.eq.s32.totalorder %s36, 1
      %p59 = por %p57, %p58
      %p61 = scmp.ne.s32.totalorder %s44, %s60
      %p62 = scmp.eq.s32.totalorder %s36, 0
      %p63 = por %p61, %p62
      %s65 = sadd.s32 %s64, 1
      %p68 = scmp.eq.s32.totalorder %s30, 1
      %p69 = scmp.ne.s32.totalorder %s64, %s66
      %p70 = scmp.eq.s32.totalorder %s30, 0
      %p71 = por %p69, %p70
      %p72 = scmp.ne.s32.totalorder %s64, %s66
      %p73 = scmp.eq.s32.totalorder %s35, 1
      %p74 = por %p72, %p73
      %p75 = scmp.ne.s32.totalorder %s66, %s67
      %p76 = scmp.eq.s32.totalorder %s35, 0
      %p77 = por %p75, %p76
      %p78 = scmp.ne.s32.totalorder %s66, %s67
      %p79 = scmp.eq.s32.totalorder %s36, 1
      %p80 = por %p78, %p79
      %p82 = scmp.ne.s32.totalorder %s67, %s81
      %p83 = scmp.eq.s32.totalorder %s36, 0
      %p84 = por %p82, %p83
      %s86 = sadd.s32 %s85, 1
      %p89 = scmp.eq.s32.totalorder %s30, 1
      %p90 = scmp.ne.s32.totalorder %s85, %s87
      %p91 = scmp.eq.s32.totalorder %s30, 0
      %p92 = por %p90, %p91
      %p93 = scmp.ne.s32.totalorder %s85, %s87
      %p94 = scmp.eq.s32.totalorder %s35, 1
      %p95 = por %p93, %p94
      %p96 = scmp.ne.s32.totalorder %s87, %s88
      %p97 = scmp.eq.s32.totalorder %s35, 0
      %p98 = por %p96, %p97
      %p99 = scmp.ne.s32.totalorder %s87, %s88
      %p100 = scmp.eq.s32.totalorder %s36, 1
      %p101 = por %p99, %p100
      %p103 = scmp.ne.s32.totalorder %s88, %s102
      %p104 = scmp.eq.s32.totalorder %s36, 0
      %p105 = por %p103, %p104
      %s107 = sadd.s32 %s106, 1
      %p110 = scmp.eq.s32.totalorder %s30, 1
      %p111 = scmp.ne.s32.totalorder %s106, %s108
      %p112 = scmp.eq.s32.totalorder %s30, 0
      %p113 = por %p111, %p112
      %p114 = scmp.ne.s32.totalorder %s106, %s108
      %p115 = scmp.eq.s32.totalorder %s35, 1
      %p116 = por %p114, %p115
      %p117 = scmp.ne.s32.totalorder %s108, %s109
      %p118 = scmp.eq.s32.totalorder %s35, 0
      %p119 = por %p117, %p118
      %p120 = scmp.ne.s32.totalorder %s108, %s109
      %p121 = scmp.eq.s32.totalorder %s36, 1
      %p122 = por %p120, %p121
      %p124 = scmp.ne.s32.totalorder %s109, %s123
      %p125 = scmp.eq.s32.totalorder %s36, 0
      %p126 = por %p124, %p125
      %s128 = sadd.s32 %s127, 1
      %p131 = scmp.eq.s32.totalorder %s30, 1
      %p132 = scmp.ne.s32.totalorder %s127, %s129
      %p133 = scmp.eq.s32.totalorder %s30, 0
      %p134 = por %p132, %p133
      %p135 = scmp.ne.s32.totalorder %s127, %s129
      %p136 = scmp.eq.s32.totalorder %s35, 1
      %p137 = por %p135, %p136
      %p138 = scmp.ne.s32.totalorder %s129, %s130
      %p139 = scmp.eq.s32.totalorder %s35, 0
      %p140 = por %p138, %p139
      %p141 = scmp.ne.s32.totalorder %s129, %s130
      %p142 = scmp.eq.s32.totalorder %s36, 1
      %p143 = por %p141, %p142
      %p145 = scmp.ne.s32.totalorder %s130, %s144
      %p146 = scmp.eq.s32.totalorder %s36, 0
      %p147 = por %p145, %p146
      %s149 = sadd.s32 %s148, 1
      %p152 = scmp.eq.s32.totalorder %s30, 1
      %p153 = scmp.ne.s32.totalorder %s148, %s150
      %p154 = scmp.eq.s32.totalorder %s30, 0
      %p155 = por %p153, %p154
      %p156 = scmp.ne.s32.totalorder %s148, %s150
      %p157 = scmp.eq.s32.totalorder %s35, 1
      %p158 = por %p156, %p157
      %p159 = scmp.ne.s32.totalorder %s150, %s151
      %p160 = scmp.eq.s32.totalorder %s35, 0
      %p161 = por %p159, %p160
      %p162 = scmp.ne.s32.totalorder %s150, %s151
      %p163 = scmp.eq.s32.totalorder %s36, 1
      %p164 = por %p162, %p163
      %p166 = scmp.ne.s32.totalorder %s151, %s165
      %p167 = scmp.eq.s32.totalorder %s36, 0
      %p168 = por %p166, %p167
      %s170 = sadd.s32 %s169, 1
      %p173 = scmp.eq.s32.totalorder %s30, 1
      %p174 = scmp.ne.s32.totalorder %s169, %s171
      %p175 = scmp.eq.s32.totalorder %s30, 0
      %p176 = por %p174, %p175
      %p177 = scmp.ne.s32.totalorder %s169, %s171
      %p178 = scmp.eq.s32.totalorder %s35, 1
      %p179 = por %p177, %p178
      %p180 = scmp.ne.s32.totalorder %s171, %s172
      %p181 = scmp.eq.s32.totalorder %s35, 0
      %p182 = por %p180, %p181
      %p183 = scmp.ne.s32.totalorder %s171, %s172
      %p184 = scmp.eq.s32.totalorder %s36, 1
      %p185 = por %p183, %p184
      %p187 = scmp.ne.s32.totalorder %s172, %s186
      %p188 = scmp.eq.s32.totalorder %s36, 0
      %p189 = por %p187, %p188
      %s191 = sadd.s32 %s190, 1
      %p194 = scmp.eq.s32.totalorder %s30, 1
      %p195 = scmp.ne.s32.totalorder %s190, %s192
      %p196 = scmp.eq.s32.totalorder %s30, 0
      %p197 = por %p195, %p196
      %p198 = scmp.ne.s32.totalorder %s190, %s192
      %p199 = scmp.eq.s32.totalorder %s35, 1
      %p200 = por %p198, %p199
      %p201 = scmp.ne.s32.totalorder %s192, %s193
      %p202 = scmp.eq.s32.totalorder %s35, 0
      %p203 = por %p201, %p202
      %p204 = scmp.ne.s32.totalorder %s192, %s193
      %p205 = scmp.eq.s32.totalorder %s36, 1
      %p206 = por %p204, %p205
      %p208 = scmp.ne.s32.totalorder %s193, %s207
      %p209 = scmp.eq.s32.totalorder %s36, 0
      %p210 = por %p208, %p209
      %s212 = sadd.s32 %s211, 1
      %p215 = scmp.eq.s32.totalorder %s30, 1
      %p216 = scmp.ne.s32.totalorder %s211, %s213
      %p217 = scmp.eq.s32.totalorder %s30, 0
      %p218 = por %p216, %p217
      %p219 = scmp.ne.s32.totalorder %s211, %s213
      %p220 = scmp.eq.s32.totalorder %s35, 1
      %p221 = por %p219, %p220
      %p222 = scmp.ne.s32.totalorder %s213, %s214
      %p223 = scmp.eq.s32.totalorder %s35, 0
      %p224 = por %p222, %p223
      %p225 = scmp.ne.s32.totalorder %s213, %s214
      %p226 = scmp.eq.s32.totalorder %s36, 1
      %p227 = por %p225, %p226
      %p229 = scmp.ne.s32.totalorder %s214, %s228
      %p230 = scmp.eq.s32.totalorder %s36, 0
      %p231 = por %p229, %p230
      %s233 = sadd.s32 %s232, 1
      %p236 = scmp.eq.s32.totalorder %s30, 1
      %p237 = scmp.ne.s32.totalorder %s232, %s234
      %p238 = scmp.eq.s32.totalorder %s30, 0
      %p239 = por %p237, %p238
      %p240 = scmp.ne.s32.totalorder %s232, %s234
      %p241 = scmp.eq.s32.totalorder %s35, 1
      %p242 = por %p240, %p241
      %p243 = scmp.ne.s32.totalorder %s234, %s235
      %p244 = scmp.eq.s32.totalorder %s35, 0
      %p245 = por %p243, %p244
      %p246 = scmp.ne.s32.totalorder %s234, %s235
      %p247 = scmp.eq.s32.totalorder %s36, 1
      %p248 = por %p246, %p247
      %p250 = scmp.ne.s32.totalorder %s235, %s249
      %p251 = scmp.eq.s32.totalorder %s36, 0
      %p252 = por %p250, %p251
      %s254 = sadd.s32 %s253, 1
      %p257 = scmp.eq.s32.totalorder %s30, 1
      %p258 = scmp.ne.s32.totalorder %s253, %s255
      %p259 = scmp.eq.s32.totalorder %s30, 0
      %p260 = por %p258, %p259
      %p261 = scmp.ne.s32.totalorder %s253, %s255
      %p262 = scmp.eq.s32.totalorder %s35, 1
      %p263 = por %p261, %p262
      %p264 = scmp.ne.s32.totalorder %s255, %s256
      %p265 = scmp.eq.s32.totalorder %s35, 0
      %p266 = por %p264, %p265
      %p267 = scmp.ne.s32.totalorder %s255, %s256
      %p268 = scmp.eq.s32.totalorder %s36, 1
      %p269 = por %p267, %p268
      %p271 = scmp.ne.s32.totalorder %s256, %s270
      %p272 = scmp.eq.s32.totalorder %s36, 0
      %p273 = por %p271, %p272
      %s275 = sadd.s32 %s274, 1
      %p278 = scmp.eq.s32.totalorder %s30, 1
      %p279 = scmp.ne.s32.totalorder %s274, %s276
      %p280 = scmp.eq.s32.totalorder %s30, 0
      %p281 = por %p279, %p280
      %p282 = scmp.ne.s32.totalorder %s274, %s276
      %p283 = scmp.eq.s32.totalorder %s35, 1
      %p284 = por %p282, %p283
      %p285 = scmp.ne.s32.totalorder %s276, %s277
      %p286 = scmp.eq.s32.totalorder %s35, 0
      %p287 = por %p285, %p286
      %p288 = scmp.ne.s32.totalorder %s276, %s277
      %p289 = scmp.eq.s32.totalorder %s36, 1
      %p290 = por %p288, %p289
      %p292 = scmp.ne.s32.totalorder %s277, %s291
      %p293 = scmp.eq.s32.totalorder %s36, 0
      %p294 = por %p292, %p293
      %s296 = sadd.s32 %s295, 1
      %p299 = scmp.eq.s32.totalorder %s30, 1
      %p300 = scmp.ne.s32.totalorder %s295, %s297
      %p301 = scmp.eq.s32.totalorder %s30, 0
      %p302 = por %p300, %p301
      %p303 = scmp.ne.s32.totalorder %s295, %s297
      %p304 = scmp.eq.s32.totalorder %s35, 1
      %p305 = por %p303, %p304
      %p306 = scmp.ne.s32.totalorder %s297, %s298
      %p307 = scmp.eq.s32.totalorder %s35, 0
      %p308 = por %p306, %p307
      %p309 = scmp.ne.s32.totalorder %s297, %s298
      %p310 = scmp.eq.s32.totalorder %s36, 1
      %p311 = por %p309, %p310
      %p313 = scmp.ne.s32.totalorder %s298, %s312
      %p314 = scmp.eq.s32.totalorder %s36, 0
      %p315 = por %p313, %p314
      %s317 = sadd.s32 %s316, 1
      %p320 = scmp.eq.s32.totalorder %s30, 1
      %p321 = scmp.ne.s32.totalorder %s316, %s318
      %p322 = scmp.eq.s32.totalorder %s30, 0
      %p323 = por %p321, %p322
      %p324 = scmp.ne.s32.totalorder %s316, %s318
      %p325 = scmp.eq.s32.totalorder %s35, 1
      %p326 = por %p324, %p325
      %p327 = scmp.ne.s32.totalorder %s318, %s319
      %p328 = scmp.eq.s32.totalorder %s35, 0
      %p329 = por %p327, %p328
      %p330 = scmp.ne.s32.totalorder %s318, %s319
      %p331 = scmp.eq.s32.totalorder %s36, 1
      %p332 = por %p330, %p331
      %p334 = scmp.ne.s32.totalorder %s319, %s333
      %p335 = scmp.eq.s32.totalorder %s36, 0
      %p336 = por %p334, %p335
      %s338 = sadd.s32 %s337, 1
      %p341 = scmp.eq.s32.totalorder %s30, 1
      %p342 = scmp.ne.s32.totalorder %s337, %s339
      %p343 = scmp.eq.s32.totalorder %s30, 0
      %p344 = por %p342, %p343
      %p345 = scmp.ne.s32.totalorder %s337, %s339
      %p346 = scmp.eq.s32.totalorder %s35, 1
      %p347 = por %p345, %p346
      %p348 = scmp.ne.s32.totalorder %s339, %s340
      %p349 = scmp.eq.s32.totalorder %s35, 0
      %p350 = por %p348, %p349
      %p351 = scmp.ne.s32.totalorder %s339, %s340
      %p352 = scmp.eq.s32.totalorder %s36, 1
      %p353 = por %p351, %p352
      %p355 = scmp.ne.s32.totalorder %s340, %s354
      %p356 = scmp.eq.s32.totalorder %s36, 0
      %p357 = por %p355, %p356
      %s359 = sadd.s32 %s358, 1
      %p362 = scmp.eq.s32.totalorder %s30, 1
      %p363 = scmp.ne.s32.totalorder %s358, %s360
      %p364 = scmp.eq.s32.totalorder %s30, 0
      %p365 = por %p363, %p364
      %p366 = scmp.ne.s32.totalorder %s358, %s360
      %p367 = scmp.eq.s32.totalorder %s35, 1
      %p368 = por %p366, %p367
      %p369 = scmp.ne.s32.totalorder %s360, %s361
      %p370 = scmp.eq.s32.totalorder %s35, 0
      %p371 = por %p369, %p370
      %p372 = scmp.ne.s32.totalorder %s360, %s361
      %p373 = scmp.eq.s32.totalorder %s36, 1
      %p374 = por %p372, %p373
      %p376 = scmp.ne.s32.totalorder %s361, %s375
      %p377 = scmp.eq.s32.totalorder %s36, 0
      %p378 = por %p376, %p377
      %s380 = sadd.s32 %s379, 1
      %p383 = scmp.eq.s32.totalorder %s30, 1
      %p384 = scmp.ne.s32.totalorder %s379, %s381
      %p385 = scmp.eq.s32.totalorder %s30, 0
      %p386 = por %p384, %p385
      %p387 = scmp.ne.s32.totalorder %s379, %s381
      %p388 = scmp.eq.s32.totalorder %s35, 1
      %p389 = por %p387, %p388
      %p390 = scmp.ne.s32.totalorder %s381, %s382
      %p391 = scmp.eq.s32.totalorder %s35, 0
      %p392 = por %p390, %p391
      %p393 = scmp.ne.s32.totalorder %s381, %s382
      %p394 = scmp.eq.s32.totalorder %s36, 1
      %p395 = por %p393, %p394
      %p397 = scmp.ne.s32.totalorder %s382, %s396
      %p398 = scmp.eq.s32.totalorder %s36, 0
      %p399 = por %p397, %p398
      %s401 = sadd.s32 %s400, 1
      %p404 = scmp.eq.s32.totalorder %s30, 1
      %p405 = scmp.ne.s32.totalorder %s400, %s402
      %p406 = scmp.eq.s32.totalorder %s30, 0
      %p407 = por %p405, %p406
      %p408 = scmp.ne.s32.totalorder %s400, %s402
      %p409 = scmp.eq.s32.totalorder %s35, 1
      %p410 = por %p408, %p409
      %p411 = scmp.ne.s32.totalorder %s402, %s403
      %p412 = scmp.eq.s32.totalorder %s35, 0
      %p413 = por %p411, %p412
      %p414 = scmp.ne.s32.totalorder %s402, %s403
      %p415 = scmp.eq.s32.totalorder %s36, 1
      %p416 = por %p414, %p415
      %p418 = scmp.ne.s32.totalorder %s403, %s417
      %p419 = scmp.eq.s32.totalorder %s36, 0
      %p420 = por %p418, %p419
      %s422 = sadd.s32 %s421, 1
      %p425 = scmp.eq.s32.totalorder %s30, 1
      %p426 = scmp.ne.s32.totalorder %s421, %s423
      %p427 = scmp.eq.s32.totalorder %s30, 0
      %p428 = por %p426, %p427
      %p429 = scmp.ne.s32.totalorder %s421, %s423
      %p430 = scmp.eq.s32.totalorder %s35, 1
      %p431 = por %p429, %p430
      %p432 = scmp.ne.s32.totalorder %s423, %s424
      %p433 = scmp.eq.s32.totalorder %s35, 0
      %p434 = por %p432, %p433
      %p435 = scmp.ne.s32.totalorder %s423, %s424
      %p436 = scmp.eq.s32.totalorder %s36, 1
      %p437 = por %p435, %p436
      %p439 = scmp.ne.s32.totalorder %s424, %s438
      %p440 = scmp.eq.s32.totalorder %s36, 0
      %p441 = por %p439, %p440
      %s443 = sadd.s32 %s442, 1
      %p446 = scmp.eq.s32.totalorder %s30, 1
      %p447 = scmp.ne.s32.totalorder %s442, %s444
      %p448 = scmp.eq.s32.totalorder %s30, 0
      %p449 = por %p447, %p448
      %p450 = scmp.ne.s32.totalorder %s442, %s444
      %p451 = scmp.eq.s32.totalorder %s35, 1
      %p452 = por %p450, %p451
      %p453 = scmp.ne.s32.totalorder %s444, %s445
      %p454 = scmp.eq.s32.totalorder %s35, 0
      %p455 = por %p453, %p454
      %p456 = scmp.ne.s32.totalorder %s444, %s445
      %p457 = scmp.eq.s32.totalorder %s36, 1
      %p458 = por %p456, %p457
      %p460 = scmp.ne.s32.totalorder %s445, %s459
      %p461 = scmp.eq.s32.totalorder %s36, 0
      %p462 = por %p460, %p461
      %s464 = sadd.s32 %s463, 1
      %p467 = scmp.eq.s32.totalorder %s30, 1
      %p468 = scmp.ne.s32.totalorder %s463, %s465
      %p469 = scmp.eq.s32.totalorder %s30, 0
      %p470 = por %p468, %p469
      %p471 = scmp.ne.s32.totalorder %s463, %s465
      %p472 = scmp.eq.s32.totalorder %s35, 1
      %p473 = por %p471, %p472
      %p474 = scmp.ne.s32.totalorder %s465, %s466
      %p475 = scmp.eq.s32.totalorder %s35, 0
      %p476 = por %p474, %p475
      %p477 = scmp.ne.s32.totalorder %s465, %s466
      %p478 = scmp.eq.s32.totalorder %s36, 1
      %p479 = por %p477, %p478
      %p481 = scmp.ne.s32.totalorder %s466, %s480
      %p482 = scmp.eq.s32.totalorder %s36, 0
      %p483 = por %p481, %p482
      %s484 = ssub.s32 %s30, %s37
      %p485 = scmp.eq.s32.totalorder %s484, 0
      %s487 = sadd.s32 %s486, 1
      %s488 = scalar_select %p485, %s486, %s487
      %p491 = pneg %p485
      %p492 = scmp.eq.s32.totalorder %s30, 1
      %p493 = por %p491, %p492
      %p494 = scmp.ne.s32.totalorder %s486, %s489
      %p495 = scmp.eq.s32.totalorder %s30, 0
      %p496 = por %p494, %p495
      %p497 = scmp.ne.s32.totalorder %s486, %s489
      %p498 = scmp.eq.s32.totalorder %s35, 1
      %p499 = por %p497, %p498
      %p500 = scmp.ne.s32.totalorder %s489, %s490
      %p501 = scmp.eq.s32.totalorder %s35, 0
      %p502 = por %p500, %p501
      %p503 = scmp.ne.s32.totalorder %s489, %s490
      %p504 = scmp.eq.s32.totalorder %s36, 1
      %p505 = por %p503, %p504
      %p507 = scmp.ne.s32.totalorder %s490, %s506
      %p508 = scmp.eq.s32.totalorder %s36, 0
      %p509 = por %p507, %p508
      %p510 = scmp.le.s32.totalorder 1, %s30
      %p511 = scmp.lt.s32.totalorder %s30, 3
      %p512 = pnand %p510, %p511
      %p513 = pneg %p512
      // Predicated region
      $region9: #{tpu_custom_call.1} parent=5 // pred_check
        _
      $region10: #{tpu_custom_call.1} parent=5 // pred_check_branch
        %515 = sbr.rel (%p512) target = $region12
      $region11: #{tpu_custom_call.1} parent=5 // pred_region
        %s516 = ssub.s32 %s30, 1
        // Predicated region
        $region13: #{tpu_custom_call.1} parent=11 // pred_check
          %p517 = pneg %p77
        $region14: #{tpu_custom_call.1} parent=11 // pred_check_branch
          %519 = sbr.rel (%p517) target = $region16
        $region15: #{tpu_custom_call.1} parent=11 // pred_region
          _
        $region16: #{tpu_custom_call.1} parent=11 // pred_fallthru
          _
        // Predicated region
        $region17: #{tpu_custom_call.1} parent=11 // pred_check
          %p520 = pneg %p98
        $region18: #{tpu_custom_call.1} parent=11 // pred_check_branch
          %522 = sbr.rel (%p520) target = $region20
        $region19: #{tpu_custom_call.1} parent=11 // pred_region
          _
        $region20: #{tpu_custom_call.1} parent=11 // pred_fallthru
          _
        // Predicated region
        $region21: #{tpu_custom_call.1} parent=11 // pred_check
          %p523 = pneg %p119
        $region22: #{tpu_custom_call.1} parent=11 // pred_check_branch
          %525 = sbr.rel (%p523) target = $region24
        $region23: #{tpu_custom_call.1} parent=11 // pred_region
          _
        $region24: #{tpu_custom_call.1} parent=11 // pred_fallthru
          _
        // Predicated region
        $region25: #{tpu_custom_call.1} parent=11 // pred_check
          %p526 = pneg %p140
        $region26: #{tpu_custom_call.1} parent=11 // pred_check_branch
          %528 = sbr.rel (%p526) target = $region28
        $region27: #{tpu_custom_call.1} parent=11 // pred_region
          _
        $region28: #{tpu_custom_call.1} parent=11 // pred_fallthru
          _
        // Predicated region
        $region29: #{tpu_custom_call.1} parent=11 // pred_check
          %p529 = pneg %p161
        $region30: #{tpu_custom_call.1} parent=11 // pred_check_branch
          %531 = sbr.rel (%p529) target = $region32
        $region31: #{tpu_custom_call.1} parent=11 // pred_region
          _
        $region32: #{tpu_custom_call.1} parent=11 // pred_fallthru
          _
        // Predicated region
        $region33: #{tpu_custom_call.1} parent=11 // pred_check
          %p532 = pneg %p182
        $region34: #{tpu_custom_call.1} parent=11 // pred_check_branch
          %534 = sbr.rel (%p532) target = $region36
        $region35: #{tpu_custom_call.1} parent=11 // pred_region
          _
        $region36: #{tpu_custom_call.1} parent=11 // pred_fallthru
          _
        // Predicated region
        $region37: #{tpu_custom_call.1} parent=11 // pred_check
          %p535 = pneg %p203
        $region38: #{tpu_custom_call.1} parent=11 // pred_check_branch
          %537 = sbr.rel (%p535) target = $region40
        $region39: #{tpu_custom_call.1} parent=11 // pred_region
          _
        $region40: #{tpu_custom_call.1} parent=11 // pred_fallthru
          _
        // Predicated region
        $region41: #{tpu_custom_call.1} parent=11 // pred_check
          %p538 = pneg %p224
        $region42: #{tpu_custom_call.1} parent=11 // pred_check_branch
          %540 = sbr.rel (%p538) target = $region44
        $region43: #{tpu_custom_call.1} parent=11 // pred_region
          _
        $region44: #{tpu_custom_call.1} parent=11 // pred_fallthru
          _
        // Predicated region
        $region45: #{tpu_custom_call.1} parent=11 // pred_check
          %p541 = pneg %p245
        $region46: #{tpu_custom_call.1} parent=11 // pred_check_branch
          %543 = sbr.rel (%p541) target = $region48
        $region47: #{tpu_custom_call.1} parent=11 // pred_region
          _
        $region48: #{tpu_custom_call.1} parent=11 // pred_fallthru
          _
        // Predicated region
        $region49: #{tpu_custom_call.1} parent=11 // pred_check
          %p544 = pneg %p266
        $region50: #{tpu_custom_call.1} parent=11 // pred_check_branch
          %546 = sbr.rel (%p544) target = $region52
        $region51: #{tpu_custom_call.1} parent=11 // pred_region
          _
        $region52: #{tpu_custom_call.1} parent=11 // pred_fallthru
          _
        // Predicated region
        $region53: #{tpu_custom_call.1} parent=11 // pred_check
          %p547 = pneg %p287
        $region54: #{tpu_custom_call.1} parent=11 // pred_check_branch
          %549 = sbr.rel (%p547) target = $region56
        $region55: #{tpu_custom_call.1} parent=11 // pred_region
          _
        $region56: #{tpu_custom_call.1} parent=11 // pred_fallthru
          _
        // Predicated region
        $region57: #{tpu_custom_call.1} parent=11 // pred_check
          %p550 = pneg %p308
        $region58: #{tpu_custom_call.1} parent=11 // pred_check_branch
          %552 = sbr.rel (%p550) target = $region60
        $region59: #{tpu_custom_call.1} parent=11 // pred_region
          _
        $region60: #{tpu_custom_call.1} parent=11 // pred_fallthru
          _
        // Predicated region
        $region61: #{tpu_custom_call.1} parent=11 // pred_check
          %p553 = pneg %p329
        $region62: #{tpu_custom_call.1} parent=11 // pred_check_branch
          %555 = sbr.rel (%p553) target = $region64
        $region63: #{tpu_custom_call.1} parent=11 // pred_region
          _
        $region64: #{tpu_custom_call.1} parent=11 // pred_fallthru
          _
        // Predicated region
        $region65: #{tpu_custom_call.1} parent=11 // pred_check
          %p556 = pneg %p350
        $region66: #{tpu_custom_call.1} parent=11 // pred_check_branch
          %558 = sbr.rel (%p556) target = $region68
        $region67: #{tpu_custom_call.1} parent=11 // pred_region
          _
        $region68: #{tpu_custom_call.1} parent=11 // pred_fallthru
          _
        // Predicated region
        $region69: #{tpu_custom_call.1} parent=11 // pred_check
          %p559 = pneg %p371
        $region70: #{tpu_custom_call.1} parent=11 // pred_check_branch
          %561 = sbr.rel (%p559) target = $region72
        $region71: #{tpu_custom_call.1} parent=11 // pred_region
          _
        $region72: #{tpu_custom_call.1} parent=11 // pred_fallthru
          _
        // Predicated region
        $region73: #{tpu_custom_call.1} parent=11 // pred_check
          %p562 = pneg %p392
        $region74: #{tpu_custom_call.1} parent=11 // pred_check_branch
          %564 = sbr.rel (%p562) target = $region76
        $region75: #{tpu_custom_call.1} parent=11 // pred_region
          _
        $region76: #{tpu_custom_call.1} parent=11 // pred_fallthru
          _
        // Predicated region
        $region77: #{tpu_custom_call.1} parent=11 // pred_check
          %p565 = pneg %p413
        $region78: #{tpu_custom_call.1} parent=11 // pred_check_branch
          %567 = sbr.rel (%p565) target = $region80
        $region79: #{tpu_custom_call.1} parent=11 // pred_region
          _
        $region80: #{tpu_custom_call.1} parent=11 // pred_fallthru
          _
        // Predicated region
        $region81: #{tpu_custom_call.1} parent=11 // pred_check
          %p568 = pneg %p434
        $region82: #{tpu_custom_call.1} parent=11 // pred_check_branch
          %570 = sbr.rel (%p568) target = $region84
        $region83: #{tpu_custom_call.1} parent=11 // pred_region
          _
        $region84: #{tpu_custom_call.1} parent=11 // pred_fallthru
          _
        // Predicated region
        $region85: #{tpu_custom_call.1} parent=11 // pred_check
          %p571 = pneg %p455
        $region86: #{tpu_custom_call.1} parent=11 // pred_check_branch
          %573 = sbr.rel (%p571) target = $region88
        $region87: #{tpu_custom_call.1} parent=11 // pred_region
          _
        $region88: #{tpu_custom_call.1} parent=11 // pred_fallthru
          _
        // Predicated region
        $region89: #{tpu_custom_call.1} parent=11 // pred_check
          %p574 = pneg %p476
        $region90: #{tpu_custom_call.1} parent=11 // pred_check_branch
          %576 = sbr.rel (%p574) target = $region92
        $region91: #{tpu_custom_call.1} parent=11 // pred_region
          _
        $region92: #{tpu_custom_call.1} parent=11 // pred_fallthru
          _
      $region12: #{tpu_custom_call.1} parent=5 // pred_fallthru
        _
      %p577 = scmp.lt.s32.totalorder %s30, 2
      // Predicated region
      $region93: #{tpu_custom_call.1} parent=5 // pred_check
        %p578 = pneg %p577
      $region94: #{tpu_custom_call.1} parent=5 // pred_check_branch
        %580 = sbr.rel (%p578) target = $region96
      $region95: #{tpu_custom_call.1} parent=5 // pred_region
        // Predicated region
        $region97: #{tpu_custom_call.1} parent=95 // pred_check
          %p581 = pneg %p50
        $region98: #{tpu_custom_call.1} parent=95 // pred_check_branch
          %583 = sbr.rel (%p581) target = $region100
        $region99: #{tpu_custom_call.1} parent=95 // pred_region
          %s584 = smul.u32 2, %s30
          %p585 = scmp.lt.s32.totalorder %s584, 3
          %s586 = scalar_select %p585, %s584, 3
          %s587 = smul.addr %s586, 7
          %s588 = smul.addr %s587, 8
          %s589 = scalar_lea.vmem %s0, %s588
          %s590 = smul.u32 2, %s30
        $region100: #{tpu_custom_call.1} parent=95 // pred_fallthru
          _
      $region96: #{tpu_custom_call.1} parent=5 // pred_fallthru
        _
      %p591 = scmp.le.s32.totalorder 1, %s30
      %p592 = scmp.lt.s32.totalorder %s30, 3
      %p593 = pnand %p591, %p592
      %p594 = pneg %p593
      // Predicated region
      $region101: #{tpu_custom_call.1} parent=5 // pred_check
        _
      $region102: #{tpu_custom_call.1} parent=5 // pred_check_branch
        %596 = sbr.rel (%p593) target = $region104
      $region103: #{tpu_custom_call.1} parent=5 // pred_region
        %s597 = ssub.s32 %s30, 1
        %s598 = smul.u32 2, %s35
        %p599 = scmp.lt.s32.totalorder %s598, 3
        %s600 = scalar_select %p599, %s598, 3
        %s601 = smul.addr %s600, 7
        %s602 = smul.addr %s601, 8
        %s603 = scalar_lea.vmem %s0, %s602
        %p604 = pneg %p56
        %p605 = pneg %p53
        %p606 = pneg %p77
        %p607 = pneg %p74
        %p608 = pneg %p98
        %p609 = pneg %p95
        %p610 = pneg %p119
        %p611 = pneg %p116
        %p612 = pneg %p140
        %p613 = pneg %p137
        %p614 = pneg %p161
        %p615 = pneg %p158
        %p616 = pneg %p182
        %p617 = pneg %p179
        %p618 = pneg %p203
        %p619 = pneg %p200
        %p620 = pneg %p224
        %p621 = pneg %p221
        %p622 = pneg %p245
        %p623 = pneg %p242
        %p624 = pneg %p266
        %p625 = pneg %p263
        %p626 = pneg %p287
        %p627 = pneg %p284
        %p628 = pneg %p308
        %p629 = pneg %p305
        %p630 = pneg %p329
        %p631 = pneg %p326
        %p632 = pneg %p350
        %p633 = pneg %p347
        %p634 = pneg %p371
        %p635 = pneg %p368
        %p636 = pneg %p392
        %p637 = pneg %p389
        %p638 = pneg %p413
        %p639 = pneg %p410
        %p640 = pneg %p434
        %p641 = pneg %p431
        %p642 = pneg %p455
        %p643 = pneg %p452
        %p644 = pneg %p476
        %p645 = pneg %p473
        %p646 = pneg %p502
        %p647 = pneg %p499
        %s648 = sand.u32 %s489, 1
        %s649 = scalar_lea.sflag [#allocation3], %s648
        %s650 = sand.u32 %s489, 1
        %s651 = smul.addr %s650, 112
        %s652 = scalar_lea.vmem [#allocation2], %s651
        %s653 = smul.u32 2, %s35
        %p654 = scmp.lt.s32.totalorder %s653, 3
        %s655 = scalar_select %p654, %s653, 3
        %s656 = smul.addr %s655, 7
        %s657 = smul.addr %s656, 8
        %s658 = scalar_lea.vmem %s0, %s657
        %s659 = smul.u32 2, %s35
        %s660 = smul.u32 2, %s35
        %v662 = vld [vmem:[%s658] sm:$0xff]
        %v663 = vld [vmem:[%s658 + $0x8] sm:$0xff]
        %v664 = vld [vmem:[%s658 + $0x10] sm:$0xff]
        %v665 = vld [vmem:[%s658 + $0x18] sm:$0xff]
        %v666 = vld [vmem:[%s658 + $0x20] sm:$0xff]
        %v667 = vld [vmem:[%s658 + $0x28] sm:$0xff]
        %v668 = vld [vmem:[%s658 + $0x30] sm:$0xff]
        %v669 = vld [vmem:[%s658 + $0x38] sm:$0xff]
        %v670 = vld [vmem:[%s658 + $0x40] sm:$0xff]
        %v671 = vld [vmem:[%s658 + $0x48] sm:$0xff]
        %v672 = vld [vmem:[%s658 + $0x50] sm:$0xff]
        %v673 = vld [vmem:[%s658 + $0x58] sm:$0xff]
        %v674 = vld [vmem:[%s658 + $0x60] sm:$0xff]
        %v675 = vld [vmem:[%s658 + $0x68] sm:$0xff]
        %v676 = vpack.c.bf16 %v669, %v662
        %v677 = vpack.c.bf16 %v670, %v663
        %v678 = vpack.c.bf16 %v671, %v664
        %v679 = vpack.c.bf16 %v672, %v665
        %v680 = vpack.c.bf16 %v673, %v666
        %v681 = vpack.c.bf16 %v674, %v667
        %v682 = vpack.c.bf16 %v675, %v668
        %v683 = vld [vmem:[%s1] sm:$0xff]
        %v684 = vld [vmem:[%s1 + $0x8] sm:$0xff]
        %v685 = vld [vmem:[%s1 + $0x10] sm:$0xff]
        %v686 = vld [vmem:[%s1 + $0x18] sm:$0xff]
        %v687 = vld [vmem:[%s1 + $0x20] sm:$0xff]
        %v688 = vld [vmem:[%s1 + $0x28] sm:$0xff]
        %v689 = vld [vmem:[%s1 + $0x30] sm:$0xff]
        %v690 = vld [vmem:[%s1 + $0x38] sm:$0xff]
        %v691 = vld [vmem:[%s1 + $0x40] sm:$0xff]
        %v692 = vld [vmem:[%s1 + $0x48] sm:$0xff]
        %v693 = vld [vmem:[%s1 + $0x50] sm:$0xff]
        %v694 = vld [vmem:[%s1 + $0x58] sm:$0xff]
        %v695 = vld [vmem:[%s1 + $0x60] sm:$0xff]
        %v696 = vld [vmem:[%s1 + $0x68] sm:$0xff]
        %v697 = vld [vmem:[%s1 + $0x70] sm:$0xff]
        %v698 = vld [vmem:[%s1 + $0x78] sm:$0xff]
        %v699 = vld [vmem:[%s1 + $0x80] sm:$0xff]
        %v700 = vld [vmem:[%s1 + $0x88] sm:$0xff]
        %v701 = vld [vmem:[%s1 + $0x90] sm:$0xff]
        %v702 = vld [vmem:[%s1 + $0x98] sm:$0xff]
        %v703 = vld [vmem:[%s1 + $0xa0] sm:$0xff]
        %v704 = vld [vmem:[%s1 + $0xa8] sm:$0xff]
        %v705 = vld [vmem:[%s1 + $0xb0] sm:$0xff]
        %v706 = vld [vmem:[%s1 + $0xb8] sm:$0xff]
        %v707 = vld [vmem:[%s1 + $0xc0] sm:$0xff]
        %v708 = vld [vmem:[%s1 + $0xc8] sm:$0xff]
        %v709 = vld [vmem:[%s1 + $0xd0] sm:$0xff]
        %v710 = vld [vmem:[%s1 + $0xd8] sm:$0xff]
        %v711 = vld [vmem:[%s1 + $0xe0] sm:$0xff]
        %v712 = vld [vmem:[%s1 + $0xe8] sm:$0xff]
        %v713 = vld [vmem:[%s1 + $0xf0] sm:$0xff]
        %v714 = vld [vmem:[%s1 + $0xf8] sm:$0xff]
        %v715 = vld [vmem:[%s1 + $0x100] sm:$0xff]
        %v716 = vld [vmem:[%s1 + $0x108] sm:$0xff]
        %v717 = vld [vmem:[%s1 + $0x110] sm:$0xff]
        %v718 = vld [vmem:[%s1 + $0x118] sm:$0xff]
        %v719 = vld [vmem:[%s1 + $0x120] sm:$0xff]
        %v720 = vld [vmem:[%s1 + $0x128] sm:$0xff]
        %v721 = vld [vmem:[%s1 + $0x130] sm:$0xff]
        %v722 = vld [vmem:[%s1 + $0x138] sm:$0xff]
        %v723 = vld [vmem:[%s1 + $0x140] sm:$0xff]
        %v724 = vld [vmem:[%s1 + $0x148] sm:$0xff]
        %v725 = vld [vmem:[%s1 + $0x150] sm:$0xff]
        %v726 = vld [vmem:[%s1 + $0x158] sm:$0xff]
        %v727 = vld [vmem:[%s1 + $0x160] sm:$0xff]
        %v728 = vld [vmem:[%s1 + $0x168] sm:$0xff]
        %v729 = vld [vmem:[%s1 + $0x170] sm:$0xff]
        %v730 = vld [vmem:[%s1 + $0x178] sm:$0xff]
        %v731 = vld [vmem:[%s1 + $0x180] sm:$0xff]
        %v732 = vld [vmem:[%s1 + $0x188] sm:$0xff]
        %v733 = vld [vmem:[%s1 + $0x190] sm:$0xff]
        %v734 = vld [vmem:[%s1 + $0x198] sm:$0xff]
        %v735 = vld [vmem:[%s1 + $0x1a0] sm:$0xff]
        %v736 = vld [vmem:[%s1 + $0x1a8] sm:$0xff]
        %v737 = vld [vmem:[%s1 + $0x1b0] sm:$0xff]
        %v738 = vld [vmem:[%s1 + $0x1b8] sm:$0xff]
        %v739 = vld [vmem:[%s1 + $0x1c0] sm:$0xff]
        %v740 = vld [vmem:[%s1 + $0x1c8] sm:$0xff]
        %v741 = vld [vmem:[%s1 + $0x1d0] sm:$0xff]
        %v742 = vld [vmem:[%s1 + $0x1d8] sm:$0xff]
        %v743 = vld [vmem:[%s1 + $0x1e0] sm:$0xff]
        %v744 = vld [vmem:[%s1 + $0x1e8] sm:$0xff]
        %v745 = vld [vmem:[%s1 + $0x1f0] sm:$0xff]
        %v746 = vld [vmem:[%s1 + $0x1f8] sm:$0xff]
        %v747 = vld [vmem:[%s1 + $0x200] sm:$0xff]
        %v748 = vld [vmem:[%s1 + $0x208] sm:$0xff]
        %v749 = vld [vmem:[%s1 + $0x210] sm:$0xff]
        %v750 = vld [vmem:[%s1 + $0x218] sm:$0xff]
        %v751 = vld [vmem:[%s1 + $0x220] sm:$0xff]
        %v752 = vld [vmem:[%s1 + $0x228] sm:$0xff]
        %v753 = vld [vmem:[%s1 + $0x230] sm:$0xff]
        %v754 = vld [vmem:[%s1 + $0x238] sm:$0xff]
        %v755 = vld [vmem:[%s1 + $0x240] sm:$0xff]
        %v756 = vld [vmem:[%s1 + $0x248] sm:$0xff]
        %v757 = vld [vmem:[%s1 + $0x250] sm:$0xff]
        %v758 = vld [vmem:[%s1 + $0x258] sm:$0xff]
        %v759 = vld [vmem:[%s1 + $0x260] sm:$0xff]
        %v760 = vld [vmem:[%s1 + $0x268] sm:$0xff]
        %v761 = vld [vmem:[%s1 + $0x270] sm:$0xff]
        %v762 = vld [vmem:[%s1 + $0x278] sm:$0xff]
        %v763 = vld [vmem:[%s1 + $0x280] sm:$0xff]
        %v764 = vld [vmem:[%s1 + $0x288] sm:$0xff]
        %v765 = vld [vmem:[%s1 + $0x290] sm:$0xff]
        %v766 = vld [vmem:[%s1 + $0x298] sm:$0xff]
        %v767 = vld [vmem:[%s1 + $0x2a0] sm:$0xff]
        %v768 = vld [vmem:[%s1 + $0x2a8] sm:$0xff]
        %v769 = vld [vmem:[%s1 + $0x2b0] sm:$0xff]
        %v770 = vld [vmem:[%s1 + $0x2b8] sm:$0xff]
        %v771 = vld [vmem:[%s1 + $0x2c0] sm:$0xff]
        %v772 = vld [vmem:[%s1 + $0x2c8] sm:$0xff]
        %v773 = vld [vmem:[%s1 + $0x2d0] sm:$0xff]
        %v774 = vld [vmem:[%s1 + $0x2d8] sm:$0xff]
        %v775 = vld [vmem:[%s1 + $0x2e0] sm:$0xff]
        %v776 = vld [vmem:[%s1 + $0x2e8] sm:$0xff]
        %v777 = vld [vmem:[%s1 + $0x2f0] sm:$0xff]
        %v778 = vld [vmem:[%s1 + $0x2f8] sm:$0xff]
        %v779 = vld [vmem:[%s1 + $0x300] sm:$0xff]
        %v780 = vld [vmem:[%s1 + $0x308] sm:$0xff]
        %v781 = vld [vmem:[%s2] sm:$0x3]
        %v783 = vlaneseq
        %v784 = vshrl.u32 %v783, 7
        %v785 = vsub.s32 0, %v784
        %v786 = vrot.slane %v781, %v785
        %v787 = vlaneseq
        %v788 = vshrl.u32 %v787, 7
        %v789 = vsub.s32 1, %v788
        %v790 = vrot.slane %v781, %v789
        %v891 = vunpack.c.l.b16 %v683
        %v892 = vunpack.c.h.b16 %v683
        %v893 = vunpack.c.l.b16 %v684
        %v894 = vunpack.c.h.b16 %v684
        %v895 = vunpack.c.l.b16 %v685
        %v896 = vunpack.c.h.b16 %v685
        %v897 = vunpack.c.l.b16 %v686
        %v898 = vunpack.c.h.b16 %v686
        %v899 = vunpack.c.l.b16 %v687
        %v900 = vunpack.c.h.b16 %v687
        %v901 = vunpack.c.l.b16 %v688
        %v902 = vunpack.c.h.b16 %v688
        %v903 = vunpack.c.l.b16 %v689
        %v904 = vunpack.c.h.b16 %v689
        %v905 = vunpack.c.l.b16 %v690
        %v906 = vunpack.c.h.b16 %v690
        %v907 = vunpack.c.l.b16 %v691
        %v908 = vunpack.c.h.b16 %v691
        %v909 = vunpack.c.l.b16 %v692
        %v910 = vunpack.c.h.b16 %v692
        %v911 = vunpack.c.l.b16 %v693
        %v912 = vunpack.c.h.b16 %v693
        %v913 = vunpack.c.l.b16 %v694
        %v914 = vunpack.c.h.b16 %v694
        %v915 = vunpack.c.l.b16 %v695
        %v916 = vunpack.c.h.b16 %v695
        %v917 = vunpack.c.l.b16 %v696
        %v918 = vunpack.c.h.b16 %v696
        %v919 = vunpack.c.l.b16 %v697
        %v920 = vunpack.c.h.b16 %v697
        %v921 = vunpack.c.l.b16 %v698
        %v922 = vunpack.c.h.b16 %v698
        %v923 = vunpack.c.l.b16 %v699
        %v924 = vunpack.c.h.b16 %v699
        %v925 = vunpack.c.l.b16 %v700
        %v926 = vunpack.c.h.b16 %v700
        %v927 = vunpack.c.l.b16 %v701
        %v928 = vunpack.c.h.b16 %v701
        %v929 = vunpack.c.l.b16 %v702
        %v930 = vunpack.c.h.b16 %v702
        %v931 = vunpack.c.l.b16 %v703
        %v932 = vunpack.c.h.b16 %v703
        %v933 = vunpack.c.l.b16 %v704
        %v934 = vunpack.c.h.b16 %v704
        %v935 = vunpack.c.l.b16 %v705
        %v936 = vunpack.c.h.b16 %v705
        %v937 = vunpack.c.l.b16 %v706
        %v938 = vunpack.c.h.b16 %v706
        %v939 = vunpack.c.l.b16 %v707
        %v940 = vunpack.c.h.b16 %v707
        %v941 = vunpack.c.l.b16 %v708
        %v942 = vunpack.c.h.b16 %v708
        %v943 = vunpack.c.l.b16 %v709
        %v944 = vunpack.c.h.b16 %v709
        %v945 = vunpack.c.l.b16 %v710
        %v946 = vunpack.c.h.b16 %v710
        %v947 = vunpack.c.l.b16 %v711
        %v948 = vunpack.c.h.b16 %v711
        %v949 = vunpack.c.l.b16 %v712
        %v950 = vunpack.c.h.b16 %v712
        %v951 = vunpack.c.l.b16 %v713
        %v952 = vunpack.c.h.b16 %v713
        %v953 = vunpack.c.l.b16 %v714
        %v954 = vunpack.c.h.b16 %v714
        %v955 = vunpack.c.l.b16 %v715
        %v956 = vunpack.c.h.b16 %v715
        %v957 = vunpack.c.l.b16 %v716
        %v958 = vunpack.c.h.b16 %v716
        %v959 = vunpack.c.l.b16 %v717
        %v960 = vunpack.c.h.b16 %v717
        %v961 = vunpack.c.l.b16 %v718
        %v962 = vunpack.c.h.b16 %v718
        %v963 = vunpack.c.l.b16 %v719
        %v964 = vunpack.c.h.b16 %v719
        %v965 = vunpack.c.l.b16 %v720
        %v966 = vunpack.c.h.b16 %v720
        %v967 = vunpack.c.l.b16 %v721
        %v968 = vunpack.c.h.b16 %v721
        %v969 = vunpack.c.l.b16 %v722
        %v970 = vunpack.c.h.b16 %v722
        %v971 = vunpack.c.l.b16 %v723
        %v972 = vunpack.c.h.b16 %v723
        %v973 = vunpack.c.l.b16 %v724
        %v974 = vunpack.c.h.b16 %v724
        %v975 = vunpack.c.l.b16 %v725
        %v976 = vunpack.c.h.b16 %v725
        %v977 = vunpack.c.l.b16 %v726
        %v978 = vunpack.c.h.b16 %v726
        %v979 = vunpack.c.l.b16 %v727
        %v980 = vunpack.c.h.b16 %v727
        %v981 = vunpack.c.l.b16 %v728
        %v982 = vunpack.c.h.b16 %v728
        %v983 = vunpack.c.l.b16 %v729
        %v984 = vunpack.c.h.b16 %v729
        %v985 = vunpack.c.l.b16 %v730
        %v986 = vunpack.c.h.b16 %v730
        %v987 = vunpack.c.l.b16 %v731
        %v988 = vunpack.c.h.b16 %v731
        %v989 = vunpack.c.l.b16 %v732
        %v990 = vunpack.c.h.b16 %v732
        %v991 = vunpack.c.l.b16 %v733
        %v992 = vunpack.c.h.b16 %v733
        %v993 = vunpack.c.l.b16 %v734
        %v994 = vunpack.c.h.b16 %v734
        %v995 = vunpack.c.l.b16 %v735
        %v996 = vunpack.c.h.b16 %v735
        %v997 = vunpack.c.l.b16 %v736
        %v998 = vunpack.c.h.b16 %v736
        %v999 = vunpack.c.l.b16 %v737
        %v1000 = vunpack.c.h.b16 %v737
        %v1001 = vunpack.c.l.b16 %v738
        %v1002 = vunpack.c.h.b16 %v738
        %v1003 = vunpack.c.l.b16 %v739
        %v1004 = vunpack.c.h.b16 %v739
        %v1005 = vunpack.c.l.b16 %v740
        %v1006 = vunpack.c.h.b16 %v740
        %v1007 = vunpack.c.l.b16 %v741
        %v1008 = vunpack.c.h.b16 %v741
        %v1009 = vunpack.c.l.b16 %v742
        %v1010 = vunpack.c.h.b16 %v742
        %v1011 = vunpack.c.l.b16 %v743
        %v1012 = vunpack.c.h.b16 %v743
        %v1013 = vunpack.c.l.b16 %v744
        %v1014 = vunpack.c.h.b16 %v744
        %v1015 = vunpack.c.l.b16 %v745
        %v1016 = vunpack.c.h.b16 %v745
        %v1017 = vunpack.c.l.b16 %v746
        %v1018 = vunpack.c.h.b16 %v746
        %v1019 = vunpack.c.l.b16 %v747
        %v1020 = vunpack.c.h.b16 %v747
        %v1021 = vunpack.c.l.b16 %v748
        %v1022 = vunpack.c.h.b16 %v748
        %v1023 = vunpack.c.l.b16 %v749
        %v1024 = vunpack.c.h.b16 %v749
        %v1025 = vunpack.c.l.b16 %v750
        %v1026 = vunpack.c.h.b16 %v750
        %v1027 = vunpack.c.l.b16 %v751
        %v1028 = vunpack.c.h.b16 %v751
        %v1029 = vunpack.c.l.b16 %v752
        %v1030 = vunpack.c.h.b16 %v752
        %v1031 = vunpack.c.l.b16 %v753
        %v1032 = vunpack.c.h.b16 %v753
        %v1033 = vunpack.c.l.b16 %v754
        %v1034 = vunpack.c.h.b16 %v754
        %v1035 = vunpack.c.l.b16 %v755
        %v1036 = vunpack.c.h.b16 %v755
        %v1037 = vunpack.c.l.b16 %v756
        %v1038 = vunpack.c.h.b16 %v756
        %v1039 = vunpack.c.l.b16 %v757
        %v1040 = vunpack.c.h.b16 %v757
        %v1041 = vunpack.c.l.b16 %v758
        %v1042 = vunpack.c.h.b16 %v758
        %v1043 = vunpack.c.l.b16 %v759
        %v1044 = vunpack.c.h.b16 %v759
        %v1045 = vunpack.c.l.b16 %v760
        %v1046 = vunpack.c.h.b16 %v760
        %v1047 = vunpack.c.l.b16 %v761
        %v1048 = vunpack.c.h.b16 %v761
        %v1049 = vunpack.c.l.b16 %v762
        %v1050 = vunpack.c.h.b16 %v762
        %v1051 = vunpack.c.l.b16 %v763
        %v1052 = vunpack.c.h.b16 %v763
        %v1053 = vunpack.c.l.b16 %v764
        %v1054 = vunpack.c.h.b16 %v764
        %v1055 = vunpack.c.l.b16 %v765
        %v1056 = vunpack.c.h.b16 %v765
        %v1057 = vunpack.c.l.b16 %v766
        %v1058 = vunpack.c.h.b16 %v766
        %v1059 = vunpack.c.l.b16 %v767
        %v1060 = vunpack.c.h.b16 %v767
        %v1061 = vunpack.c.l.b16 %v768
        %v1062 = vunpack.c.h.b16 %v768
        %v1063 = vunpack.c.l.b16 %v769
        %v1064 = vunpack.c.h.b16 %v769
        %v1065 = vunpack.c.l.b16 %v770
        %v1066 = vunpack.c.h.b16 %v770
        %v1067 = vunpack.c.l.b16 %v771
        %v1068 = vunpack.c.h.b16 %v771
        %v1069 = vunpack.c.l.b16 %v772
        %v1070 = vunpack.c.h.b16 %v772
        %v1071 = vunpack.c.l.b16 %v773
        %v1072 = vunpack.c.h.b16 %v773
        %v1073 = vunpack.c.l.b16 %v774
        %v1074 = vunpack.c.h.b16 %v774
        %v1075 = vunpack.c.l.b16 %v775
        %v1076 = vunpack.c.h.b16 %v775
        %v1077 = vunpack.c.l.b16 %v776
        %v1078 = vunpack.c.h.b16 %v776
        %v1079 = vunpack.c.l.b16 %v777
        %v1080 = vunpack.c.h.b16 %v777
        %v1081 = vunpack.c.l.b16 %v778
        %v1082 = vunpack.c.h.b16 %v778
        %v1083 = vunpack.c.l.b16 %v779
        %v1084 = vunpack.c.h.b16 %v779
        %v1085 = vunpack.c.l.b16 %v780
        %v1086 = vunpack.c.h.b16 %v780
        %v1087 = vpack.c.b16 %v893, %v891
        %v1088 = vpack.c.b16 %v894, %v892
        %v1089 = vpack.c.b16 %v897, %v895
        %v1090 = vpack.c.b16 %v898, %v896
        %v1091 = vpack.c.b16 %v901, %v899
        %v1092 = vpack.c.b16 %v902, %v900
        %v1093 = vpack.c.b16 %v905, %v903
        %v1094 = vpack.c.b16 %v906, %v904
        %v1095 = vpack.c.b16 %v909, %v907
        %v1096 = vpack.c.b16 %v910, %v908
        %v1097 = vpack.c.b16 %v913, %v911
        %v1098 = vpack.c.b16 %v914, %v912
        %v1099 = vpack.c.b16 %v917, %v915
        %v1100 = vpack.c.b16 %v918, %v916
        %v1101 = vpack.c.b16 %v921, %v919
        %v1102 = vpack.c.b16 %v922, %v920
        %v1103 = vpack.c.b16 %v925, %v923
        %v1104 = vpack.c.b16 %v926, %v924
        %v1105 = vpack.c.b16 %v929, %v927
        %v1106 = vpack.c.b16 %v930, %v928
        %v1107 = vpack.c.b16 %v933, %v931
        %v1108 = vpack.c.b16 %v934, %v932
        %v1109 = vpack.c.b16 %v937, %v935
        %v1110 = vpack.c.b16 %v938, %v936
        %v1111 = vpack.c.b16 %v941, %v939
        %v1112 = vpack.c.b16 %v942, %v940
        %v1113 = vpack.c.b16 %v945, %v943
        %v1114 = vpack.c.b16 %v946, %v944
        %v1115 = vpack.c.b16 %v949, %v947
        %v1116 = vpack.c.b16 %v950, %v948
        %v1117 = vpack.c.b16 %v953, %v951
        %v1118 = vpack.c.b16 %v954, %v952
        %v1119 = vpack.c.b16 %v957, %v955
        %v1120 = vpack.c.b16 %v958, %v956
        %v1121 = vpack.c.b16 %v961, %v959
        %v1122 = vpack.c.b16 %v962, %v960
        %v1123 = vpack.c.b16 %v965, %v963
        %v1124 = vpack.c.b16 %v966, %v964
        %v1125 = vpack.c.b16 %v969, %v967
        %v1126 = vpack.c.b16 %v970, %v968
        %v1127 = vpack.c.b16 %v973, %v971
        %v1128 = vpack.c.b16 %v974, %v972
        %v1129 = vpack.c.b16 %v977, %v975
        %v1130 = vpack.c.b16 %v978, %v976
        %v1131 = vpack.c.b16 %v981, %v979
        %v1132 = vpack.c.b16 %v982, %v980
        %v1133 = vpack.c.b16 %v985, %v983
        %v1134 = vpack.c.b16 %v986, %v984
        %v1135 = vpack.c.b16 %v989, %v987
        %v1136 = vpack.c.b16 %v990, %v988
        %v1137 = vpack.c.b16 %v993, %v991
        %v1138 = vpack.c.b16 %v994, %v992
        %v1139 = vpack.c.b16 %v997, %v995
        %v1140 = vpack.c.b16 %v998, %v996
        %v1141 = vpack.c.b16 %v1001, %v999
        %v1142 = vpack.c.b16 %v1002, %v1000
        %v1143 = vpack.c.b16 %v1005, %v1003
        %v1144 = vpack.c.b16 %v1006, %v1004
        %v1145 = vpack.c.b16 %v1009, %v1007
        %v1146 = vpack.c.b16 %v1010, %v1008
        %v1147 = vpack.c.b16 %v1013, %v1011
        %v1148 = vpack.c.b16 %v1014, %v1012
        %v1149 = vpack.c.b16 %v1017, %v1015
        %v1150 = vpack.c.b16 %v1018, %v1016
        %v1151 = vpack.c.b16 %v1021, %v1019
        %v1152 = vpack.c.b16 %v1022, %v1020
        %v1153 = vpack.c.b16 %v1025, %v1023
        %v1154 = vpack.c.b16 %v1026, %v1024
        %v1155 = vpack.c.b16 %v1029, %v1027
        %v1156 = vpack.c.b16 %v1030, %v1028
        %v1157 = vpack.c.b16 %v1033, %v1031
        %v1158 = vpack.c.b16 %v1034, %v1032
        %v1159 = vpack.c.b16 %v1037, %v1035
        %v1160 = vpack.c.b16 %v1038, %v1036
        %v1161 = vpack.c.b16 %v1041, %v1039
        %v1162 = vpack.c.b16 %v1042, %v1040
        %v1163 = vpack.c.b16 %v1045, %v1043
        %v1164 = vpack.c.b16 %v1046, %v1044
        %v1165 = vpack.c.b16 %v1049, %v1047
        %v1166 = vpack.c.b16 %v1050, %v1048
        %v1167 = vpack.c.b16 %v1053, %v1051
        %v1168 = vpack.c.b16 %v1054, %v1052
        %v1169 = vpack.c.b16 %v1057, %v1055
        %v1170 = vpack.c.b16 %v1058, %v1056
        %v1171 = vpack.c.b16 %v1061, %v1059
        %v1172 = vpack.c.b16 %v1062, %v1060
        %v1173 = vpack.c.b16 %v1065, %v1063
        %v1174 = vpack.c.b16 %v1066, %v1064
        %v1175 = vpack.c.b16 %v1069, %v1067
        %v1176 = vpack.c.b16 %v1070, %v1068
        %v1177 = vpack.c.b16 %v1073, %v1071
        %v1178 = vpack.c.b16 %v1074, %v1072
        %v1179 = vpack.c.b16 %v1077, %v1075
        %v1180 = vpack.c.b16 %v1078, %v1076
        %v1181 = vpack.c.b16 %v1081, %v1079
        %v1182 = vpack.c.b16 %v1082, %v1080
        %v1183 = vpack.c.b16 %v1085, %v1083
        %v1184 = vpack.c.b16 %v1086, %v1084
        %vm1283 = vcmask 130048
        %v1285 = vsel %vm1283, %v682, 0
        %1287 = vmatprep.subr.bf16.mxu0 %v1102
        %1288 = vmatpush1.bf16.msra.mxu0 %v1101
        %1289 = vmatprep.subr.bf16.mxu0 %v1100
        %1290 = vmatpush1.bf16.msra.mxu0 %v1099
        %1291 = vmatprep.subr.bf16.mxu0 %v1098
        %1292 = vmatpush1.bf16.msra.mxu0 %v1097
        %1293 = vmatprep.subr.bf16.mxu0 %v1096
        %1294 = vmatpush1.bf16.msra.mxu0 %v1095
        %1295 = vmatprep.subr.bf16.mxu0 %v1094
        %1296 = vmatpush1.bf16.msra.mxu0 %v1093
        %1297 = vmatprep.subr.bf16.mxu0 %v1092
        %1298 = vmatpush1.bf16.msra.mxu0 %v1091
        %1299 = vmatprep.subr.bf16.mxu0 %v1090
        %1300 = vmatpush1.bf16.msra.mxu0 %v1089
        %1301 = vmatprep.subr.bf16.mxu0 %v1088
        %1302 = vmatpush1.bf16.msra.mxu0 %v1087
        %1303 = vmatprep.subr.bf16.mxu0 %v1118
        %1304 = vmatpush2.bf16.msra.mxu0 %v1117
        %1305 = vmatprep.subr.bf16.mxu0 %v1116
        %1306 = vmatpush2.bf16.msra.mxu0 %v1115
        %1307 = vmatprep.subr.bf16.mxu0 %v1114
        %1308 = vmatpush2.bf16.msra.mxu0 %v1113
        %1309 = vmatprep.subr.bf16.mxu0 %v1112
        %1310 = vmatpush2.bf16.msra.mxu0 %v1111
        %1311 = vmatprep.subr.bf16.mxu0 %v1110
        %1312 = vmatpush2.bf16.msra.mxu0 %v1109
        %1313 = vmatprep.subr.bf16.mxu0 %v1108
        %1314 = vmatpush2.bf16.msra.mxu0 %v1107
        %1315 = vmatprep.subr.bf16.mxu0 %v1106
        %1316 = vmatpush2.bf16.msra.mxu0 %v1105
        %1317 = vmatprep.subr.bf16.mxu0 %v1104
        %1318 = vmatpush2.bf16.msra.mxu0 %v1103
        %1319 = vmatprep.mubr.bf16.mxu0 %v677
        %1320 = vmatmul.mubr.bf16.gmra.mxu0 %v676
        %v1321 = vpop.f32.mrf.mxu0
        %v1322 = vadd.f32 %v786, %v1321
        %v1323 = vpop.f32.mrf.mxu0
        %v1324 = vadd.f32 %v790, %v1323
        %v1325 = vpop.f32.mrf.mxu0
        %v1326 = vadd.f32 %v786, %v1325
        %v1327 = vpop.f32.mrf.mxu0
        %v1328 = vadd.f32 %v790, %v1327
        %1329 = vdwg.mxu0
        %1330 = vmatprep.subr.bf16.mxu0 %v1134
        %1331 = vmatpush1.bf16.msra.mxu0 %v1133
        %1332 = vmatprep.subr.bf16.mxu0 %v1132
        %1333 = vmatpush1.bf16.msra.mxu0 %v1131
        %1334 = vmatprep.subr.bf16.mxu0 %v1130
        %1335 = vmatpush1.bf16.msra.mxu0 %v1129
        %1336 = vmatprep.subr.bf16.mxu0 %v1128
        %1337 = vmatpush1.bf16.msra.mxu0 %v1127
        %1338 = vmatprep.subr.bf16.mxu0 %v1126
        %1339 = vmatpush1.bf16.msra.mxu0 %v1125
        %1340 = vmatprep.subr.bf16.mxu0 %v1124
        %1341 = vmatpush1.bf16.msra.mxu0 %v1123
        %1342 = vmatprep.subr.bf16.mxu0 %v1122
        %1343 = vmatpush1.bf16.msra.mxu0 %v1121
        %1344 = vmatprep.subr.bf16.mxu0 %v1120
        %1345 = vmatpush1.bf16.msra.mxu0 %v1119
        %1346 = vmatprep.subr.bf16.mxu0 %v1150
        %1347 = vmatpush2.bf16.msra.mxu0 %v1149
        %1348 = vmatprep.subr.bf16.mxu0 %v1148
        %1349 = vmatpush2.bf16.msra.mxu0 %v1147
        %1350 = vmatprep.subr.bf16.mxu0 %v1146
        %1351 = vmatpush2.bf16.msra.mxu0 %v1145
        %1352 = vmatprep.subr.bf16.mxu0 %v1144
        %1353 = vmatpush2.bf16.msra.mxu0 %v1143
        %1354 = vmatprep.subr.bf16.mxu0 %v1142
        %1355 = vmatpush2.bf16.msra.mxu0 %v1141
        %1356 = vmatprep.subr.bf16.mxu0 %v1140
        %1357 = vmatpush2.bf16.msra.mxu0 %v1139
        %1358 = vmatprep.subr.bf16.mxu0 %v1138
        %1359 = vmatpush2.bf16.msra.mxu0 %v1137
        %1360 = vmatprep.subr.bf16.mxu0 %v1136
        %1361 = vmatpush2.bf16.msra.mxu0 %v1135
        %1362 = vmatprep.mubr.bf16.mxu0 %v679
        %1363 = vmatmul.mubr.bf16.gmra.mxu0 %v678
        %v1364 = vpop.f32.mrf.mxu0
        %v1365 = vadd.f32 %v1322, %v1364
        %v1366 = vpop.f32.mrf.mxu0
        %v1367 = vadd.f32 %v1324, %v1366
        %v1368 = vpop.f32.mrf.mxu0
        %v1369 = vadd.f32 %v1326, %v1368
        %v1370 = vpop.f32.mrf.mxu0
        %v1371 = vadd.f32 %v1328, %v1370
        %1372 = vdwg.mxu0
        %1373 = vmatprep.subr.bf16.mxu0 %v1166
        %1374 = vmatpush1.bf16.msra.mxu0 %v1165
        %1375 = vmatprep.subr.bf16.mxu0 %v1164
        %1376 = vmatpush1.bf16.msra.mxu0 %v1163
        %1377 = vmatprep.subr.bf16.mxu0 %v1162
        %1378 = vmatpush1.bf16.msra.mxu0 %v1161
        %1379 = vmatprep.subr.bf16.mxu0 %v1160
        %1380 = vmatpush1.bf16.msra.mxu0 %v1159
        %1381 = vmatprep.subr.bf16.mxu0 %v1158
        %1382 = vmatpush1.bf16.msra.mxu0 %v1157
        %1383 = vmatprep.subr.bf16.mxu0 %v1156
        %1384 = vmatpush1.bf16.msra.mxu0 %v1155
        %1385 = vmatprep.subr.bf16.mxu0 %v1154
        %1386 = vmatpush1.bf16.msra.mxu0 %v1153
        %1387 = vmatprep.subr.bf16.mxu0 %v1152
        %1388 = vmatpush1.bf16.msra.mxu0 %v1151
        %1389 = vmatprep.subr.bf16.mxu0 %v1182
        %1390 = vmatpush2.bf16.msra.mxu0 %v1181
        %1391 = vmatprep.subr.bf16.mxu0 %v1180
        %1392 = vmatpush2.bf16.msra.mxu0 %v1179
        %1393 = vmatprep.subr.bf16.mxu0 %v1178
        %1394 = vmatpush2.bf16.msra.mxu0 %v1177
        %1395 = vmatprep.subr.bf16.mxu0 %v1176
        %1396 = vmatpush2.bf16.msra.mxu0 %v1175
        %1397 = vmatprep.subr.bf16.mxu0 %v1174
        %1398 = vmatpush2.bf16.msra.mxu0 %v1173
        %1399 = vmatprep.subr.bf16.mxu0 %v1172
        %1400 = vmatpush2.bf16.msra.mxu0 %v1171
        %1401 = vmatprep.subr.bf16.mxu0 %v1170
        %1402 = vmatpush2.bf16.msra.mxu0 %v1169
        %1403 = vmatprep.subr.bf16.mxu0 %v1168
        %1404 = vmatpush2.bf16.msra.mxu0 %v1167
        %1405 = vmatprep.mubr.bf16.mxu0 %v681
        %1406 = vmatmul.mubr.bf16.gmra.mxu0 %v680
        %v1407 = vpop.f32.mrf.mxu0
        %v1408 = vadd.f32 %v1365, %v1407
        %v1409 = vpop.f32.mrf.mxu0
        %v1410 = vadd.f32 %v1367, %v1409
        %v1411 = vpop.f32.mrf.mxu0
        %v1412 = vadd.f32 %v1369, %v1411
        %v1413 = vpop.f32.mrf.mxu0
        %v1414 = vadd.f32 %v1371, %v1413
        %1415 = vdwg.mxu0
        %1416 = vmatprep.subr.bf16.mxu0 0
        %1417 = vmatpush1.bf16.msra.mxu0 0
        %1418 = vmatprep.subr.bf16.mxu0 0
        %1419 = vmatpush1.bf16.msra.mxu0 0
        %1420 = vmatprep.subr.bf16.mxu0 0
        %1421 = vmatpush1.bf16.msra.mxu0 0
        %1422 = vmatprep.subr.bf16.mxu0 0
        %1423 = vmatpush1.bf16.msra.mxu0 0
        %1424 = vmatprep.subr.bf16.mxu0 0
        %1425 = vmatpush1.bf16.msra.mxu0 0
        %1426 = vmatprep.subr.bf16.mxu0 0
        %1427 = vmatpush1.bf16.msra.mxu0 0
        %1428 = vmatprep.subr.bf16.mxu0 0
        %1429 = vmatpush1.bf16.msra.mxu0 0
        %1430 = vmatprep.subr.bf16.mxu0 %v1184
        %1431 = vmatpush1.bf16.msra.mxu0 %v1183
        %1432 = vmatprep.subr.bf16.mxu0 0
        %1433 = vmatpush2.bf16.msra.mxu0 0
        %1434 = vmatprep.subr.bf16.mxu0 0
        %1435 = vmatpush2.bf16.msra.mxu0 0
        %1436 = vmatprep.subr.bf16.mxu0 0
        %1437 = vmatpush2.bf16.msra.mxu0 0
        %1438 = vmatprep.subr.bf16.mxu0 0
        %1439 = vmatpush2.bf16.msra.mxu0 0
        %1440 = vmatprep.subr.bf16.mxu0 0
        %1441 = vmatpush2.bf16.msra.mxu0 0
        %1442 = vmatprep.subr.bf16.mxu0 0
        %1443 = vmatpush2.bf16.msra.mxu0 0
        %1444 = vmatprep.subr.bf16.mxu0 0
        %1445 = vmatpush2.bf16.msra.mxu0 0
        %1446 = vmatprep.subr.bf16.mxu0 0
        %1447 = vmatpush2.bf16.msra.mxu0 0
        %1448 = vmatprep.mubr.bf16.mxu0 0
        %1449 = vmatmul.mubr.bf16.gmra.mxu0 %v1285
        %v1450 = vpop.f32.mrf.mxu0
        %v1451 = vadd.f32 %v1408, %v1450
        %v1452 = vpop.f32.mrf.mxu0
        %v1453 = vadd.f32 %v1410, %v1452
        %v1454 = vpop.f32.mrf.mxu0
        %v1455 = vadd.f32 %v1412, %v1454
        %v1456 = vpop.f32.mrf.mxu0
        %v1457 = vadd.f32 %v1414, %v1456
        %1458 = vdwg.mxu0
        %v1459 = vmax.f32 %v1451, 0.0
        %v1460 = vmax.f32 %v1453, 0.0
        %v1461 = vmax.f32 %v1455, 0.0
        %v1462 = vmax.f32 %v1457, 0.0
        %v1463 = vpack.c.bf16 %v1461, %v1459
        %v1464 = vpack.c.bf16 %v1462, %v1460
        %v1465 = vld [vmem:[%s3] sm:$0xf]
        %v1466 = vld [vmem:[%s3 + $0x4] sm:$0xf]
        %v1467 = vld [vmem:[%s3 + $0x8] sm:$0xf]
        %v1468 = vld [vmem:[%s3 + $0xc] sm:$0xf]
        %v1469 = vld [vmem:[%s3 + $0x10] sm:$0xf]
        %v1470 = vld [vmem:[%s3 + $0x14] sm:$0xf]
        %v1471 = vld [vmem:[%s3 + $0x18] sm:$0xf]
        %v1472 = vld [vmem:[%s3 + $0x1c] sm:$0xf]
        %v1473 = vld [vmem:[%s3 + $0x20] sm:$0xf]
        %v1474 = vld [vmem:[%s3 + $0x24] sm:$0xf]
        %v1475 = vld [vmem:[%s3 + $0x28] sm:$0xf]
        %v1476 = vld [vmem:[%s3 + $0x2c] sm:$0xf]
        %v1477 = vld [vmem:[%s3 + $0x30] sm:$0xf]
        %v1478 = vld [vmem:[%s3 + $0x34] sm:$0xf]
        %v1479 = vld [vmem:[%s3 + $0x38] sm:$0xf]
        %v1480 = vld [vmem:[%s3 + $0x3c] sm:$0xf]
        %v1481 = vld [vmem:[%s3 + $0x40] sm:$0xf]
        %v1482 = vld [vmem:[%s3 + $0x44] sm:$0xf]
        %v1483 = vld [vmem:[%s3 + $0x48] sm:$0xf]
        %v1484 = vld [vmem:[%s3 + $0x4c] sm:$0xf]
        %v1485 = vld [vmem:[%s3 + $0x50] sm:$0xf]
        %v1486 = vld [vmem:[%s3 + $0x54] sm:$0xf]
        %v1487 = vld [vmem:[%s3 + $0x58] sm:$0xf]
        %v1488 = vld [vmem:[%s3 + $0x5c] sm:$0xf]
        %v1489 = vld [vmem:[%s3 + $0x60] sm:$0xf]
        %v1490 = vld [vmem:[%s3 + $0x64] sm:$0xf]
        %v1491 = vld [vmem:[%s3 + $0x68] sm:$0xf]
        %v1492 = vld [vmem:[%s3 + $0x6c] sm:$0xf]
        %v1493 = vld [vmem:[%s3 + $0x70] sm:$0xf]
        %v1494 = vld [vmem:[%s3 + $0x74] sm:$0xf]
        %v1495 = vld [vmem:[%s3 + $0x78] sm:$0xf]
        %v1496 = vld [vmem:[%s3 + $0x7c] sm:$0xf]
        %v1497 = vld [vmem:[%s4] sm:$0x1]
        %v1499 = vlaneseq
        %v1500 = vshrl.u32 %v1499, 7
        %v1501 = vsub.s32 0, %v1500
        %v1502 = vrot.slane %v1497, %v1501
        %v1536 = vunpack.c.l.b16 %v1465
        %v1537 = vunpack.c.l.b16 %v1466
        %v1538 = vunpack.c.l.b16 %v1467
        %v1539 = vunpack.c.l.b16 %v1468
        %v1540 = vunpack.c.l.b16 %v1469
        %v1541 = vunpack.c.l.b16 %v1470
        %v1542 = vunpack.c.l.b16 %v1471
        %v1543 = vunpack.c.l.b16 %v1472
        %v1544 = vunpack.c.l.b16 %v1473
        %v1545 = vunpack.c.l.b16 %v1474
        %v1546 = vunpack.c.l.b16 %v1475
        %v1547 = vunpack.c.l.b16 %v1476
        %v1548 = vunpack.c.l.b16 %v1477
        %v1549 = vunpack.c.l.b16 %v1478
        %v1550 = vunpack.c.l.b16 %v1479
        %v1551 = vunpack.c.l.b16 %v1480
        %v1552 = vunpack.c.l.b16 %v1481
        %v1553 = vunpack.c.l.b16 %v1482
        %v1554 = vunpack.c.l.b16 %v1483
        %v1555 = vunpack.c.l.b16 %v1484
        %v1556 = vunpack.c.l.b16 %v1485
        %v1557 = vunpack.c.l.b16 %v1486
        %v1558 = vunpack.c.l.b16 %v1487
        %v1559 = vunpack.c.l.b16 %v1488
        %v1560 = vunpack.c.l.b16 %v1489
        %v1561 = vunpack.c.l.b16 %v1490
        %v1562 = vunpack.c.l.b16 %v1491
        %v1563 = vunpack.c.l.b16 %v1492
        %v1564 = vunpack.c.l.b16 %v1493
        %v1565 = vunpack.c.l.b16 %v1494
        %v1566 = vunpack.c.l.b16 %v1495
        %v1567 = vunpack.c.l.b16 %v1496
        %v1568 = vpack.c.b16 %v1537, %v1536
        %v1569 = vpack.c.b16 %v1539, %v1538
        %v1570 = vpack.c.b16 %v1541, %v1540
        %v1571 = vpack.c.b16 %v1543, %v1542
        %v1572 = vpack.c.b16 %v1545, %v1544
        %v1573 = vpack.c.b16 %v1547, %v1546
        %v1574 = vpack.c.b16 %v1549, %v1548
        %v1575 = vpack.c.b16 %v1551, %v1550
        %v1576 = vpack.c.b16 %v1553, %v1552
        %v1577 = vpack.c.b16 %v1555, %v1554
        %v1578 = vpack.c.b16 %v1557, %v1556
        %v1579 = vpack.c.b16 %v1559, %v1558
        %v1580 = vpack.c.b16 %v1561, %v1560
        %v1581 = vpack.c.b16 %v1563, %v1562
        %v1582 = vpack.c.b16 %v1565, %v1564
        %v1583 = vpack.c.b16 %v1567, %v1566
        %1600 = vmatprep.subr.bf16.mxu0 0
        %1601 = vmatpush1.bf16.msra.mxu0 %v1575
        %1602 = vmatprep.subr.bf16.mxu0 0
        %1603 = vmatpush1.bf16.msra.mxu0 %v1574
        %1604 = vmatprep.subr.bf16.mxu0 0
        %1605 = vmatpush1.bf16.msra.mxu0 %v1573
        %1606 = vmatprep.subr.bf16.mxu0 0
        %1607 = vmatpush1.bf16.msra.mxu0 %v1572
        %1608 = vmatprep.subr.bf16.mxu0 0
        %1609 = vmatpush1.bf16.msra.mxu0 %v1571
        %1610 = vmatprep.subr.bf16.mxu0 0
        %1611 = vmatpush1.bf16.msra.mxu0 %v1570
        %1612 = vmatprep.subr.bf16.mxu0 0
        %1613 = vmatpush1.bf16.msra.mxu0 %v1569
        %1614 = vmatprep.subr.bf16.mxu0 0
        %1615 = vmatpush1.bf16.msra.mxu0 %v1568
        %1616 = vmatprep.subr.bf16.mxu0 0
        %1617 = vmatpush2.bf16.msra.mxu0 %v1583
        %1618 = vmatprep.subr.bf16.mxu0 0
        %1619 = vmatpush2.bf16.msra.mxu0 %v1582
        %1620 = vmatprep.subr.bf16.mxu0 0
        %1621 = vmatpush2.bf16.msra.mxu0 %v1581
        %1622 = vmatprep.subr.bf16.mxu0 0
        %1623 = vmatpush2.bf16.msra.mxu0 %v1580
        %1624 = vmatprep.subr.bf16.mxu0 0
        %1625 = vmatpush2.bf16.msra.mxu0 %v1579
        %1626 = vmatprep.subr.bf16.mxu0 0
        %1627 = vmatpush2.bf16.msra.mxu0 %v1578
        %1628 = vmatprep.subr.bf16.mxu0 0
        %1629 = vmatpush2.bf16.msra.mxu0 %v1577
        %1630 = vmatprep.subr.bf16.mxu0 0
        %1631 = vmatpush2.bf16.msra.mxu0 %v1576
        %1632 = vmatprep.mubr.bf16.mxu0 %v1464
        %1633 = vmatmul.mubr.bf16.gmra.mxu0 %v1463
        %v1634 = vpop.f32.mrf.mxu0
        %v1635 = vadd.f32 %v1502, %v1634
        %v1636 = vpop.f32.mrf.mxu0
        %v1637 = vpop.f32.mrf.mxu0
        %v1638 = vadd.f32 %v1502, %v1637
        %v1639 = vpop.f32.mrf.mxu0
        %1640 = vdwg.mxu0
        %v1641 = vmax.f32 %v1635, 0.0
        %v1642 = vmax.f32 %v1638, 0.0
        %v1643 = vpack.c.bf16 %v1642, %v1641
        %v1644 = vld [vmem:[%s5] sm:$0xf]
        %v1645 = vld [vmem:[%s5 + $0x4] sm:$0xf]
        %v1646 = vld [vmem:[%s5 + $0x8] sm:$0xf]
        %v1647 = vld [vmem:[%s5 + $0xc] sm:$0xf]
        %v1648 = vld [vmem:[%s5 + $0x10] sm:$0xf]
        %v1649 = vld [vmem:[%s5 + $0x14] sm:$0xf]
        %v1650 = vld [vmem:[%s5 + $0x18] sm:$0xf]
        %v1651 = vld [vmem:[%s5 + $0x1c] sm:$0xf]
        %v1652 = vld [vmem:[%s5 + $0x20] sm:$0xf]
        %v1653 = vld [vmem:[%s5 + $0x24] sm:$0xf]
        %v1654 = vld [vmem:[%s5 + $0x28] sm:$0xf]
        %v1655 = vld [vmem:[%s5 + $0x2c] sm:$0xf]
        %v1656 = vld [vmem:[%s5 + $0x30] sm:$0xf]
        %v1657 = vld [vmem:[%s5 + $0x34] sm:$0xf]
        %v1658 = vld [vmem:[%s5 + $0x38] sm:$0xf]
        %v1659 = vld [vmem:[%s5 + $0x3c] sm:$0xf]
        %v1660 = vld [vmem:[%s6] sm:$0x1]
        %v1662 = vlaneseq
        %v1663 = vshrl.u32 %v1662, 7
        %v1664 = vsub.s32 0, %v1663
        %v1665 = vrot.slane %v1660, %v1664
        %v1683 = vunpack.c.l.b16 %v1644
        %v1684 = vunpack.c.l.b16 %v1645
        %v1685 = vunpack.c.l.b16 %v1646
        %v1686 = vunpack.c.l.b16 %v1647
        %v1687 = vunpack.c.l.b16 %v1648
        %v1688 = vunpack.c.l.b16 %v1649
        %v1689 = vunpack.c.l.b16 %v1650
        %v1690 = vunpack.c.l.b16 %v1651
        %v1691 = vunpack.c.l.b16 %v1652
        %v1692 = vunpack.c.l.b16 %v1653
        %v1693 = vunpack.c.l.b16 %v1654
        %v1694 = vunpack.c.l.b16 %v1655
        %v1695 = vunpack.c.l.b16 %v1656
        %v1696 = vunpack.c.l.b16 %v1657
        %v1697 = vunpack.c.l.b16 %v1658
        %v1698 = vunpack.c.l.b16 %v1659
        %v1699 = vpack.c.b16 %v1684, %v1683
        %v1700 = vpack.c.b16 %v1686, %v1685
        %v1701 = vpack.c.b16 %v1688, %v1687
        %v1702 = vpack.c.b16 %v1690, %v1689
        %v1703 = vpack.c.b16 %v1692, %v1691
        %v1704 = vpack.c.b16 %v1694, %v1693
        %v1705 = vpack.c.b16 %v1696, %v1695
        %v1706 = vpack.c.b16 %v1698, %v1697
        %1715 = vmatprep.subr.bf16.mxu0 0
        %1716 = vmatpush1.bf16.msra.mxu0 %v1706
        %1717 = vmatprep.subr.bf16.mxu0 0
        %1718 = vmatpush1.bf16.msra.mxu0 %v1705
        %1719 = vmatprep.subr.bf16.mxu0 0
        %1720 = vmatpush1.bf16.msra.mxu0 %v1704
        %1721 = vmatprep.subr.bf16.mxu0 0
        %1722 = vmatpush1.bf16.msra.mxu0 %v1703
        %1723 = vmatprep.subr.bf16.mxu0 0
        %1724 = vmatpush1.bf16.msra.mxu0 %v1702
        %1725 = vmatprep.subr.bf16.mxu0 0
        %1726 = vmatpush1.bf16.msra.mxu0 %v1701
        %1727 = vmatprep.subr.bf16.mxu0 0
        %1728 = vmatpush1.bf16.msra.mxu0 %v1700
        %1729 = vmatprep.subr.bf16.mxu0 0
        %1730 = vmatpush1.bf16.msra.mxu0 %v1699
        %1731 = vmatprep.subr.bf16.mxu0 0
        %1732 = vmatpush2.bf16.msra.mxu0 0
        %1733 = vmatprep.subr.bf16.mxu0 0
        %1734 = vmatpush2.bf16.msra.mxu0 0
        %1735 = vmatprep.subr.bf16.mxu0 0
        %1736 = vmatpush2.bf16.msra.mxu0 0
        %1737 = vmatprep.subr.bf16.mxu0 0
        %1738 = vmatpush2.bf16.msra.mxu0 0
        %1739 = vmatprep.subr.bf16.mxu0 0
        %1740 = vmatpush2.bf16.msra.mxu0 0
        %1741 = vmatprep.subr.bf16.mxu0 0
        %1742 = vmatpush2.bf16.msra.mxu0 0
        %1743 = vmatprep.subr.bf16.mxu0 0
        %1744 = vmatpush2.bf16.msra.mxu0 0
        %1745 = vmatprep.subr.bf16.mxu0 0
        %1746 = vmatpush2.bf16.msra.mxu0 0
        %1747 = vmatprep.mubr.bf16.mxu0 0
        %1748 = vmatmul.mubr.bf16.gmra.mxu0 %v1643
        %v1749 = vpop.f32.mrf.mxu0
        %v1750 = vadd.f32 %v1665, %v1749
        %v1751 = vpop.f32.mrf.mxu0
        %v1752 = vpop.f32.mrf.mxu0
        %v1753 = vadd.f32 %v1665, %v1752
        %v1754 = vpop.f32.mrf.mxu0
        %1755 = vdwg.mxu0
        %v1756 = vmax.f32 %v1750, 0.0
        %v1757 = vmax.f32 %v1753, 0.0
        %v1758 = vpack.c.bf16 %v1757, %v1756
        %v1759 = vld [vmem:[%s7] sm:$0xf]
        %v1760 = vld [vmem:[%s7 + $0x4] sm:$0xf]
        %v1761 = vld [vmem:[%s7 + $0x8] sm:$0xf]
        %v1762 = vld [vmem:[%s7 + $0xc] sm:$0xf]
        %v1763 = vld [vmem:[%s7 + $0x10] sm:$0xf]
        %v1764 = vld [vmem:[%s7 + $0x14] sm:$0xf]
        %v1765 = vld [vmem:[%s7 + $0x18] sm:$0xf]
        %v1766 = vld [vmem:[%s7 + $0x1c] sm:$0xf]
        %v1767 = vld [vmem:[%s8] sm:$0x1]
        %v1769 = vlaneseq
        %v1770 = vshrl.u32 %v1769, 7
        %v1771 = vsub.s32 0, %v1770
        %v1772 = vrot.slane %v1767, %v1771
        %v1782 = vunpack.c.l.b16 %v1759
        %v1783 = vunpack.c.l.b16 %v1760
        %v1784 = vunpack.c.l.b16 %v1761
        %v1785 = vunpack.c.l.b16 %v1762
        %v1786 = vunpack.c.l.b16 %v1763
        %v1787 = vunpack.c.l.b16 %v1764
        %v1788 = vunpack.c.l.b16 %v1765
        %v1789 = vunpack.c.l.b16 %v1766
        %v1790 = vpack.c.b16 %v1783, %v1782
        %v1791 = vpack.c.b16 %v1785, %v1784
        %v1792 = vpack.c.b16 %v1787, %v1786
        %v1793 = vpack.c.b16 %v1789, %v1788
        %vm1798 = vcmask 523264
        %v1800 = vsel %vm1798, %v1758, 0
        %1802 = vmatprep.subr.bf16.mxu0 0
        %1803 = vmatpush1.bf16.msra.mxu0 0
        %1804 = vmatprep.subr.bf16.mxu0 0
        %1805 = vmatpush1.bf16.msra.mxu0 0
        %1806 = vmatprep.subr.bf16.mxu0 0
        %1807 = vmatpush1.bf16.msra.mxu0 0
        %1808 = vmatprep.subr.bf16.mxu0 0
        %1809 = vmatpush1.bf16.msra.mxu0 0
        %1810 = vmatprep.subr.bf16.mxu0 0
        %1811 = vmatpush1.bf16.msra.mxu0 %v1793
        %1812 = vmatprep.subr.bf16.mxu0 0
        %1813 = vmatpush1.bf16.msra.mxu0 %v1792
        %1814 = vmatprep.subr.bf16.mxu0 0
        %1815 = vmatpush1.bf16.msra.mxu0 %v1791
        %1816 = vmatprep.subr.bf16.mxu0 0
        %1817 = vmatpush1.bf16.msra.mxu0 %v1790
        %1818 = vmatprep.subr.bf16.mxu0 0
        %1819 = vmatpush2.bf16.msra.mxu0 0
        %1820 = vmatprep.subr.bf16.mxu0 0
        %1821 = vmatpush2.bf16.msra.mxu0 0
        %1822 = vmatprep.subr.bf16.mxu0 0
        %1823 = vmatpush2.bf16.msra.mxu0 0
        %1824 = vmatprep.subr.bf16.mxu0 0
        %1825 = vmatpush2.bf16.msra.mxu0 0
        %1826 = vmatprep.subr.bf16.mxu0 0
        %1827 = vmatpush2.bf16.msra.mxu0 0
        %1828 = vmatprep.subr.bf16.mxu0 0
        %1829 = vmatpush2.bf16.msra.mxu0 0
        %1830 = vmatprep.subr.bf16.mxu0 0
        %1831 = vmatpush2.bf16.msra.mxu0 0
        %1832 = vmatprep.subr.bf16.mxu0 0
        %1833 = vmatpush2.bf16.msra.mxu0 0
        %1834 = vmatprep.mubr.bf16.mxu0 0
        %1835 = vmatmul.mubr.bf16.gmra.mxu0 %v1800
        %v1836 = vpop.f32.mrf.mxu0
        %v1837 = vadd.f32 %v1772, %v1836
        %v1838 = vpop.f32.mrf.mxu0
        %v1839 = vpop.f32.mrf.mxu0
        %v1840 = vadd.f32 %v1772, %v1839
        %v1841 = vpop.f32.mrf.mxu0
        %1842 = vdwg.mxu0
        %v1843 = vmax.f32 %v1837, 0.0
        %v1844 = vmax.f32 %v1840, 0.0
        %v1845 = vpack.c.bf16 %v1844, %v1843
        %v1846 = vld [vmem:[%s9] sm:$0xf]
        %v1847 = vld [vmem:[%s9 + $0x4] sm:$0xf]
        %v1848 = vld [vmem:[%s9 + $0x8] sm:$0xf]
        %v1849 = vld [vmem:[%s9 + $0xc] sm:$0xf]
        %v1850 = vld [vmem:[%s10] sm:$0x1]
        %v1852 = vlaneseq
        %v1853 = vshrl.u32 %v1852, 7
        %v1854 = vsub.s32 0, %v1853
        %v1855 = vrot.slane %v1850, %v1854
        %v1861 = vunpack.c.l.b16 %v1846
        %v1862 = vunpack.c.l.b16 %v1847
        %v1863 = vunpack.c.l.b16 %v1848
        %v1864 = vunpack.c.l.b16 %v1849
        %v1865 = vpack.c.b16 %v1862, %v1861
        %v1866 = vpack.c.b16 %v1864, %v1863
        %vm1869 = vcmask 261120
        %v1871 = vsel %vm1869, %v1845, 0
        %1873 = vmatprep.subr.bf16.mxu0 0
        %1874 = vmatpush1.bf16.msra.mxu0 0
        %1875 = vmatprep.subr.bf16.mxu0 0
        %1876 = vmatpush1.bf16.msra.mxu0 0
        %1877 = vmatprep.subr.bf16.mxu0 0
        %1878 = vmatpush1.bf16.msra.mxu0 0
        %1879 = vmatprep.subr.bf16.mxu0 0
        %1880 = vmatpush1.bf16.msra.mxu0 0
        %1881 = vmatprep.subr.bf16.mxu0 0
        %1882 = vmatpush1.bf16.msra.mxu0 0
        %1883 = vmatprep.subr.bf16.mxu0 0
        %1884 = vmatpush1.bf16.msra.mxu0 0
        %1885 = vmatprep.subr.bf16.mxu0 0
        %1886 = vmatpush1.bf16.msra.mxu0 %v1866
        %1887 = vmatprep.subr.bf16.mxu0 0
        %1888 = vmatpush1.bf16.msra.mxu0 %v1865
        %1889 = vmatprep.subr.bf16.mxu0 0
        %1890 = vmatpush2.bf16.msra.mxu0 0
        %1891 = vmatprep.subr.bf16.mxu0 0
        %1892 = vmatpush2.bf16.msra.mxu0 0
        %1893 = vmatprep.subr.bf16.mxu0 0
        %1894 = vmatpush2.bf16.msra.mxu0 0
        %1895 = vmatprep.subr.bf16.mxu0 0
        %1896 = vmatpush2.bf16.msra.mxu0 0
        %1897 = vmatprep.subr.bf16.mxu0 0
        %1898 = vmatpush2.bf16.msra.mxu0 0
        %1899 = vmatprep.subr.bf16.mxu0 0
        %1900 = vmatpush2.bf16.msra.mxu0 0
        %1901 = vmatprep.subr.bf16.mxu0 0
        %1902 = vmatpush2.bf16.msra.mxu0 0
        %1903 = vmatprep.subr.bf16.mxu0 0
        %1904 = vmatpush2.bf16.msra.mxu0 0
        %1905 = vmatprep.mubr.bf16.mxu0 0
        %1906 = vmatmul.mubr.bf16.gmra.mxu0 %v1871
        %v1907 = vpop.f32.mrf.mxu0
        %v1908 = vadd.f32 %v1855, %v1907
        %v1909 = vpop.f32.mrf.mxu0
        %v1910 = vpop.f32.mrf.mxu0
        %v1911 = vadd.f32 %v1855, %v1910
        %v1912 = vpop.f32.mrf.mxu0
        %1913 = vdwg.mxu0
        %v1914 = vmax.f32 %v1908, 0.0
        %v1915 = vmax.f32 %v1911, 0.0
        %v1916 = vpack.c.bf16 %v1915, %v1914
        %v1917 = vld [vmem:[%s11] sm:$0xf]
        %v1918 = vld [vmem:[%s11 + $0x4] sm:$0xf]
        %v1919 = vld [vmem:[%s12] sm:$0x1]
        %v1921 = vlaneseq
        %v1922 = vshrl.u32 %v1921, 7
        %v1923 = vsub.s32 0, %v1922
        %v1924 = vrot.slane %v1919, %v1923
        %v1928 = vunpack.c.l.b16 %v1917
        %v1929 = vunpack.c.l.b16 %v1918
        %v1930 = vpack.c.b16 %v1929, %v1928
        %v1933 = vsel %vm1283, %v1916, 0
        %1935 = vmatprep.subr.bf16.mxu0 0
        %1936 = vmatpush1.bf16.msra.mxu0 0
        %1937 = vmatprep.subr.bf16.mxu0 0
        %1938 = vmatpush1.bf16.msra.mxu0 0
        %1939 = vmatprep.subr.bf16.mxu0 0
        %1940 = vmatpush1.bf16.msra.mxu0 0
        %1941 = vmatprep.subr.bf16.mxu0 0
        %1942 = vmatpush1.bf16.msra.mxu0 0
        %1943 = vmatprep.subr.bf16.mxu0 0
        %1944 = vmatpush1.bf16.msra.mxu0 0
        %1945 = vmatprep.subr.bf16.mxu0 0
        %1946 = vmatpush1.bf16.msra.mxu0 0
        %1947 = vmatprep.subr.bf16.mxu0 0
        %1948 = vmatpush1.bf16.msra.mxu0 0
        %1949 = vmatprep.subr.bf16.mxu0 0
        %1950 = vmatpush1.bf16.msra.mxu0 %v1930
        %1951 = vmatprep.subr.bf16.mxu0 0
        %1952 = vmatpush2.bf16.msra.mxu0 0
        %1953 = vmatprep.subr.bf16.mxu0 0
        %1954 = vmatpush2.bf16.msra.mxu0 0
        %1955 = vmatprep.subr.bf16.mxu0 0
        %1956 = vmatpush2.bf16.msra.mxu0 0
        %1957 = vmatprep.subr.bf16.mxu0 0
        %1958 = vmatpush2.bf16.msra.mxu0 0
        %1959 = vmatprep.subr.bf16.mxu0 0
        %1960 = vmatpush2.bf16.msra.mxu0 0
        %1961 = vmatprep.subr.bf16.mxu0 0
        %1962 = vmatpush2.bf16.msra.mxu0 0
        %1963 = vmatprep.subr.bf16.mxu0 0
        %1964 = vmatpush2.bf16.msra.mxu0 0
        %1965 = vmatprep.subr.bf16.mxu0 0
        %1966 = vmatpush2.bf16.msra.mxu0 0
        %1967 = vmatprep.mubr.bf16.mxu0 0
        %1968 = vmatmul.mubr.bf16.gmra.mxu0 %v1933
        %v1969 = vpop.f32.mrf.mxu0
        %v1970 = vadd.f32 %v1924, %v1969
        %v1971 = vpop.f32.mrf.mxu0
        %v1972 = vpop.f32.mrf.mxu0
        %v1973 = vadd.f32 %v1924, %v1972
        %v1974 = vpop.f32.mrf.mxu0
        %1975 = vdwg.mxu0
        %v1976 = vmax.f32 %v1970, 0.0
        %v1977 = vmax.f32 %v1973, 0.0
        %v1978 = vpack.c.bf16 %v1977, %v1976
        %v1979 = vld [vmem:[%s13] sm:$0xf]
        %v1980 = vld [vmem:[%s13 + $0x4] sm:$0xf]
        %v1981 = vld [vmem:[%s13 + $0x8] sm:$0xf]
        %v1982 = vld [vmem:[%s13 + $0xc] sm:$0xf]
        %v1983 = vld [vmem:[%s14] sm:$0x1]
        %v1985 = vlaneseq
        %v1986 = vshrl.u32 %v1985, 7
        %v1987 = vsub.s32 0, %v1986
        %v1988 = vrot.slane %v1983, %v1987
        %v1994 = vunpack.c.l.b16 %v1979
        %v1995 = vunpack.c.l.b16 %v1980
        %v1996 = vunpack.c.l.b16 %v1981
        %v1997 = vunpack.c.l.b16 %v1982
        %v1998 = vpack.c.b16 %v1995, %v1994
        %v1999 = vpack.c.b16 %v1997, %v1996
        %v2003 = vsel %vm1869, %v1978, 0
        %2005 = vmatprep.subr.bf16.mxu0 0
        %2006 = vmatpush1.bf16.msra.mxu0 0
        %2007 = vmatprep.subr.bf16.mxu0 0
        %2008 = vmatpush1.bf16.msra.mxu0 0
        %2009 = vmatprep.subr.bf16.mxu0 0
        %2010 = vmatpush1.bf16.msra.mxu0 0
        %2011 = vmatprep.subr.bf16.mxu0 0
        %2012 = vmatpush1.bf16.msra.mxu0 0
        %2013 = vmatprep.subr.bf16.mxu0 0
        %2014 = vmatpush1.bf16.msra.mxu0 0
        %2015 = vmatprep.subr.bf16.mxu0 0
        %2016 = vmatpush1.bf16.msra.mxu0 0
        %2017 = vmatprep.subr.bf16.mxu0 0
        %2018 = vmatpush1.bf16.msra.mxu0 %v1999
        %2019 = vmatprep.subr.bf16.mxu0 0
        %2020 = vmatpush1.bf16.msra.mxu0 %v1998
        %2021 = vmatprep.subr.bf16.mxu0 0
        %2022 = vmatpush2.bf16.msra.mxu0 0
        %2023 = vmatprep.subr.bf16.mxu0 0
        %2024 = vmatpush2.bf16.msra.mxu0 0
        %2025 = vmatprep.subr.bf16.mxu0 0
        %2026 = vmatpush2.bf16.msra.mxu0 0
        %2027 = vmatprep.subr.bf16.mxu0 0
        %2028 = vmatpush2.bf16.msra.mxu0 0
        %2029 = vmatprep.subr.bf16.mxu0 0
        %2030 = vmatpush2.bf16.msra.mxu0 0
        %2031 = vmatprep.subr.bf16.mxu0 0
        %2032 = vmatpush2.bf16.msra.mxu0 0
        %2033 = vmatprep.subr.bf16.mxu0 0
        %2034 = vmatpush2.bf16.msra.mxu0 0
        %2035 = vmatprep.subr.bf16.mxu0 0
        %2036 = vmatpush2.bf16.msra.mxu0 0
        %2037 = vmatprep.mubr.bf16.mxu0 0
        %2038 = vmatmul.mubr.bf16.gmra.mxu0 %v2003
        %v2039 = vpop.f32.mrf.mxu0
        %v2040 = vadd.f32 %v1988, %v2039
        %v2041 = vpop.f32.mrf.mxu0
        %v2042 = vpop.f32.mrf.mxu0
        %v2043 = vadd.f32 %v1988, %v2042
        %v2044 = vpop.f32.mrf.mxu0
        %2045 = vdwg.mxu0
        %v2046 = vmax.f32 %v2040, 0.0
        %v2047 = vmax.f32 %v2043, 0.0
        %v2048 = vpack.c.bf16 %v2047, %v2046
        %v2049 = vld [vmem:[%s15] sm:$0xf]
        %v2050 = vld [vmem:[%s15 + $0x4] sm:$0xf]
        %v2051 = vld [vmem:[%s15 + $0x8] sm:$0xf]
        %v2052 = vld [vmem:[%s15 + $0xc] sm:$0xf]
        %v2053 = vld [vmem:[%s15 + $0x10] sm:$0xf]
        %v2054 = vld [vmem:[%s15 + $0x14] sm:$0xf]
        %v2055 = vld [vmem:[%s15 + $0x18] sm:$0xf]
        %v2056 = vld [vmem:[%s15 + $0x1c] sm:$0xf]
        %v2057 = vld [vmem:[%s16] sm:$0x1]
        %v2059 = vlaneseq
        %v2060 = vshrl.u32 %v2059, 7
        %v2061 = vsub.s32 0, %v2060
        %v2062 = vrot.slane %v2057, %v2061
        %v2072 = vunpack.c.l.b16 %v2049
        %v2073 = vunpack.c.l.b16 %v2050
        %v2074 = vunpack.c.l.b16 %v2051
        %v2075 = vunpack.c.l.b16 %v2052
        %v2076 = vunpack.c.l.b16 %v2053
        %v2077 = vunpack.c.l.b16 %v2054
        %v2078 = vunpack.c.l.b16 %v2055
        %v2079 = vunpack.c.l.b16 %v2056
        %v2080 = vpack.c.b16 %v2073, %v2072
        %v2081 = vpack.c.b16 %v2075, %v2074
        %v2082 = vpack.c.b16 %v2077, %v2076
        %v2083 = vpack.c.b16 %v2079, %v2078
        %v2089 = vsel %vm1798, %v2048, 0
        %2091 = vmatprep.subr.bf16.mxu0 0
        %2092 = vmatpush1.bf16.msra.mxu0 0
        %2093 = vmatprep.subr.bf16.mxu0 0
        %2094 = vmatpush1.bf16.msra.mxu0 0
        %2095 = vmatprep.subr.bf16.mxu0 0
        %2096 = vmatpush1.bf16.msra.mxu0 0
        %2097 = vmatprep.subr.bf16.mxu0 0
        %2098 = vmatpush1.bf16.msra.mxu0 0
        %2099 = vmatprep.subr.bf16.mxu0 0
        %2100 = vmatpush1.bf16.msra.mxu0 %v2083
        %2101 = vmatprep.subr.bf16.mxu0 0
        %2102 = vmatpush1.bf16.msra.mxu0 %v2082
        %2103 = vmatprep.subr.bf16.mxu0 0
        %2104 = vmatpush1.bf16.msra.mxu0 %v2081
        %2105 = vmatprep.subr.bf16.mxu0 0
        %2106 = vmatpush1.bf16.msra.mxu0 %v2080
        %2107 = vmatprep.subr.bf16.mxu0 0
        %2108 = vmatpush2.bf16.msra.mxu0 0
        %2109 = vmatprep.subr.bf16.mxu0 0
        %2110 = vmatpush2.bf16.msra.mxu0 0
        %2111 = vmatprep.subr.bf16.mxu0 0
        %2112 = vmatpush2.bf16.msra.mxu0 0
        %2113 = vmatprep.subr.bf16.mxu0 0
        %2114 = vmatpush2.bf16.msra.mxu0 0
        %2115 = vmatprep.subr.bf16.mxu0 0
        %2116 = vmatpush2.bf16.msra.mxu0 0
        %2117 = vmatprep.subr.bf16.mxu0 0
        %2118 = vmatpush2.bf16.msra.mxu0 0
        %2119 = vmatprep.subr.bf16.mxu0 0
        %2120 = vmatpush2.bf16.msra.mxu0 0
        %2121 = vmatprep.subr.bf16.mxu0 0
        %2122 = vmatpush2.bf16.msra.mxu0 0
        %2123 = vmatprep.mubr.bf16.mxu0 0
        %2124 = vmatmul.mubr.bf16.gmra.mxu0 %v2089
        %v2125 = vpop.f32.mrf.mxu0
        %v2126 = vadd.f32 %v2062, %v2125
        %v2127 = vpop.f32.mrf.mxu0
        %v2128 = vpop.f32.mrf.mxu0
        %v2129 = vadd.f32 %v2062, %v2128
        %v2130 = vpop.f32.mrf.mxu0
        %2131 = vdwg.mxu0
        %v2132 = vmax.f32 %v2126, 0.0
        %v2133 = vmax.f32 %v2129, 0.0
        %v2134 = vpack.c.bf16 %v2133, %v2132
        %v2135 = vld [vmem:[%s17] sm:$0xff]
        %v2136 = vld [vmem:[%s17 + $0x8] sm:$0xff]
        %v2137 = vld [vmem:[%s17 + $0x10] sm:$0xff]
        %v2138 = vld [vmem:[%s17 + $0x18] sm:$0xff]
        %v2139 = vld [vmem:[%s17 + $0x20] sm:$0xff]
        %v2140 = vld [vmem:[%s17 + $0x28] sm:$0xff]
        %v2141 = vld [vmem:[%s17 + $0x30] sm:$0xff]
        %v2142 = vld [vmem:[%s17 + $0x38] sm:$0xff]
        %v2143 = vld [vmem:[%s17 + $0x40] sm:$0xff]
        %v2144 = vld [vmem:[%s17 + $0x48] sm:$0xff]
        %v2145 = vld [vmem:[%s17 + $0x50] sm:$0xff]
        %v2146 = vld [vmem:[%s17 + $0x58] sm:$0xff]
        %v2147 = vld [vmem:[%s17 + $0x60] sm:$0xff]
        %v2148 = vld [vmem:[%s17 + $0x68] sm:$0xff]
        %v2149 = vld [vmem:[%s17 + $0x70] sm:$0xff]
        %v2150 = vld [vmem:[%s17 + $0x78] sm:$0xff]
        %v2151 = vld [vmem:[%s18] sm:$0x3]
        %v2153 = vlaneseq
        %v2154 = vshrl.u32 %v2153, 7
        %v2155 = vsub.s32 0, %v2154
        %v2156 = vrot.slane %v2151, %v2155
        %v2157 = vlaneseq
        %v2158 = vshrl.u32 %v2157, 7
        %v2159 = vsub.s32 1, %v2158
        %v2160 = vrot.slane %v2151, %v2159
        %v2179 = vunpack.c.l.b16 %v2135
        %v2180 = vunpack.c.h.b16 %v2135
        %v2181 = vunpack.c.l.b16 %v2136
        %v2182 = vunpack.c.h.b16 %v2136
        %v2183 = vunpack.c.l.b16 %v2137
        %v2184 = vunpack.c.h.b16 %v2137
        %v2185 = vunpack.c.l.b16 %v2138
        %v2186 = vunpack.c.h.b16 %v2138
        %v2187 = vunpack.c.l.b16 %v2139
        %v2188 = vunpack.c.h.b16 %v2139
        %v2189 = vunpack.c.l.b16 %v2140
        %v2190 = vunpack.c.h.b16 %v2140
        %v2191 = vunpack.c.l.b16 %v2141
        %v2192 = vunpack.c.h.b16 %v2141
        %v2193 = vunpack.c.l.b16 %v2142
        %v2194 = vunpack.c.h.b16 %v2142
        %v2195 = vunpack.c.l.b16 %v2143
        %v2196 = vunpack.c.h.b16 %v2143
        %v2197 = vunpack.c.l.b16 %v2144
        %v2198 = vunpack.c.h.b16 %v2144
        %v2199 = vunpack.c.l.b16 %v2145
        %v2200 = vunpack.c.h.b16 %v2145
        %v2201 = vunpack.c.l.b16 %v2146
        %v2202 = vunpack.c.h.b16 %v2146
        %v2203 = vunpack.c.l.b16 %v2147
        %v2204 = vunpack.c.h.b16 %v2147
        %v2205 = vunpack.c.l.b16 %v2148
        %v2206 = vunpack.c.h.b16 %v2148
        %v2207 = vunpack.c.l.b16 %v2149
        %v2208 = vunpack.c.h.b16 %v2149
        %v2209 = vunpack.c.l.b16 %v2150
        %v2210 = vunpack.c.h.b16 %v2150
        %v2211 = vpack.c.b16 %v2181, %v2179
        %v2212 = vpack.c.b16 %v2182, %v2180
        %v2213 = vpack.c.b16 %v2185, %v2183
        %v2214 = vpack.c.b16 %v2186, %v2184
        %v2215 = vpack.c.b16 %v2189, %v2187
        %v2216 = vpack.c.b16 %v2190, %v2188
        %v2217 = vpack.c.b16 %v2193, %v2191
        %v2218 = vpack.c.b16 %v2194, %v2192
        %v2219 = vpack.c.b16 %v2197, %v2195
        %v2220 = vpack.c.b16 %v2198, %v2196
        %v2221 = vpack.c.b16 %v2201, %v2199
        %v2222 = vpack.c.b16 %v2202, %v2200
        %v2223 = vpack.c.b16 %v2205, %v2203
        %v2224 = vpack.c.b16 %v2206, %v2204
        %v2225 = vpack.c.b16 %v2209, %v2207
        %v2226 = vpack.c.b16 %v2210, %v2208
        %2243 = vmatprep.subr.bf16.mxu0 %v2226
        %2244 = vmatpush1.bf16.msra.mxu0 %v2225
        %2245 = vmatprep.subr.bf16.mxu0 %v2224
        %2246 = vmatpush1.bf16.msra.mxu0 %v2223
        %2247 = vmatprep.subr.bf16.mxu0 %v2222
        %2248 = vmatpush1.bf16.msra.mxu0 %v2221
        %2249 = vmatprep.subr.bf16.mxu0 %v2220
        %2250 = vmatpush1.bf16.msra.mxu0 %v2219
        %2251 = vmatprep.subr.bf16.mxu0 %v2218
        %2252 = vmatpush1.bf16.msra.mxu0 %v2217
        %2253 = vmatprep.subr.bf16.mxu0 %v2216
        %2254 = vmatpush1.bf16.msra.mxu0 %v2215
        %2255 = vmatprep.subr.bf16.mxu0 %v2214
        %2256 = vmatpush1.bf16.msra.mxu0 %v2213
        %2257 = vmatprep.subr.bf16.mxu0 %v2212
        %2258 = vmatpush1.bf16.msra.mxu0 %v2211
        %2259 = vmatprep.subr.bf16.mxu0 0
        %2260 = vmatpush2.bf16.msra.mxu0 0
        %2261 = vmatprep.subr.bf16.mxu0 0
        %2262 = vmatpush2.bf16.msra.mxu0 0
        %2263 = vmatprep.subr.bf16.mxu0 0
        %2264 = vmatpush2.bf16.msra.mxu0 0
        %2265 = vmatprep.subr.bf16.mxu0 0
        %2266 = vmatpush2.bf16.msra.mxu0 0
        %2267 = vmatprep.subr.bf16.mxu0 0
        %2268 = vmatpush2.bf16.msra.mxu0 0
        %2269 = vmatprep.subr.bf16.mxu0 0
        %2270 = vmatpush2.bf16.msra.mxu0 0
        %2271 = vmatprep.subr.bf16.mxu0 0
        %2272 = vmatpush2.bf16.msra.mxu0 0
        %2273 = vmatprep.subr.bf16.mxu0 0
        %2274 = vmatpush2.bf16.msra.mxu0 0
        %2275 = vmatprep.mubr.bf16.mxu0 0
        %2276 = vmatmul.mubr.bf16.gmra.mxu0 %v2134
        %v2277 = vpop.f32.mrf.mxu0
        %v2278 = vadd.f32 %v2156, %v2277
        %v2279 = vpop.f32.mrf.mxu0
        %v2280 = vadd.f32 %v2160, %v2279
        %v2281 = vpop.f32.mrf.mxu0
        %v2282 = vadd.f32 %v2156, %v2281
        %v2283 = vpop.f32.mrf.mxu0
        %v2284 = vadd.f32 %v2160, %v2283
        %2285 = vdwg.mxu0
        %v2286 = vmax.f32 %v2278, 0.0
        %v2287 = vmax.f32 %v2280, 0.0
        %v2288 = vmax.f32 %v2282, 0.0
        %v2289 = vmax.f32 %v2284, 0.0
        %v2290 = vpack.c.bf16 %v2288, %v2286
        %v2291 = vpack.c.bf16 %v2289, %v2287
        %v2292 = vld [vmem:[%s19] sm:$0xff]
        %v2293 = vld [vmem:[%s19 + $0x8] sm:$0xff]
        %v2294 = vld [vmem:[%s19 + $0x10] sm:$0xff]
        %v2295 = vld [vmem:[%s19 + $0x18] sm:$0xf]
        %v2296 = vld [vmem:[%s19 + $0x1c] sm:$0xff]
        %v2297 = vld [vmem:[%s19 + $0x24] sm:$0xff]
        %v2298 = vld [vmem:[%s19 + $0x2c] sm:$0xff]
        %v2299 = vld [vmem:[%s19 + $0x34] sm:$0xf]
        %v2300 = vld [vmem:[%s19 + $0x38] sm:$0xff]
        %v2301 = vld [vmem:[%s19 + $0x40] sm:$0xff]
        %v2302 = vld [vmem:[%s19 + $0x48] sm:$0xff]
        %v2303 = vld [vmem:[%s19 + $0x50] sm:$0xf]
        %v2304 = vld [vmem:[%s19 + $0x54] sm:$0xff]
        %v2305 = vld [vmem:[%s19 + $0x5c] sm:$0xff]
        %v2306 = vld [vmem:[%s19 + $0x64] sm:$0xff]
        %v2307 = vld [vmem:[%s19 + $0x6c] sm:$0xf]
        %v2308 = vld [vmem:[%s19 + $0x70] sm:$0xff]
        %v2309 = vld [vmem:[%s19 + $0x78] sm:$0xff]
        %v2310 = vld [vmem:[%s19 + $0x80] sm:$0xff]
        %v2311 = vld [vmem:[%s19 + $0x88] sm:$0xf]
        %v2312 = vld [vmem:[%s19 + $0x8c] sm:$0xff]
        %v2313 = vld [vmem:[%s19 + $0x94] sm:$0xff]
        %v2314 = vld [vmem:[%s19 + $0x9c] sm:$0xff]
        %v2315 = vld [vmem:[%s19 + $0xa4] sm:$0xf]
        %v2316 = vld [vmem:[%s19 + $0xa8] sm:$0xff]
        %v2317 = vld [vmem:[%s19 + $0xb0] sm:$0xff]
        %v2318 = vld [vmem:[%s19 + $0xb8] sm:$0xff]
        %v2319 = vld [vmem:[%s19 + $0xc0] sm:$0xf]
        %v2320 = vld [vmem:[%s19 + $0xc4] sm:$0xff]
        %v2321 = vld [vmem:[%s19 + $0xcc] sm:$0xff]
        %v2322 = vld [vmem:[%s19 + $0xd4] sm:$0xff]
        %v2323 = vld [vmem:[%s19 + $0xdc] sm:$0xf]
        %v2324 = vld [vmem:[%s19 + $0xe0] sm:$0xff]
        %v2325 = vld [vmem:[%s19 + $0xe8] sm:$0xff]
        %v2326 = vld [vmem:[%s19 + $0xf0] sm:$0xff]
        %v2327 = vld [vmem:[%s19 + $0xf8] sm:$0xf]
        %v2328 = vld [vmem:[%s19 + $0xfc] sm:$0xff]
        %v2329 = vld [vmem:[%s19 + $0x104] sm:$0xff]
        %v2330 = vld [vmem:[%s19 + $0x10c] sm:$0xff]
        %v2331 = vld [vmem:[%s19 + $0x114] sm:$0xf]
        %v2332 = vld [vmem:[%s19 + $0x118] sm:$0xff]
        %v2333 = vld [vmem:[%s19 + $0x120] sm:$0xff]
        %v2334 = vld [vmem:[%s19 + $0x128] sm:$0xff]
        %v2335 = vld [vmem:[%s19 + $0x130] sm:$0xf]
        %v2336 = vld [vmem:[%s19 + $0x134] sm:$0xff]
        %v2337 = vld [vmem:[%s19 + $0x13c] sm:$0xff]
        %v2338 = vld [vmem:[%s19 + $0x144] sm:$0xff]
        %v2339 = vld [vmem:[%s19 + $0x14c] sm:$0xf]
        %v2340 = vld [vmem:[%s19 + $0x150] sm:$0xff]
        %v2341 = vld [vmem:[%s19 + $0x158] sm:$0xff]
        %v2342 = vld [vmem:[%s19 + $0x160] sm:$0xff]
        %v2343 = vld [vmem:[%s19 + $0x168] sm:$0xf]
        %v2344 = vld [vmem:[%s19 + $0x16c] sm:$0xff]
        %v2345 = vld [vmem:[%s19 + $0x174] sm:$0xff]
        %v2346 = vld [vmem:[%s19 + $0x17c] sm:$0xff]
        %v2347 = vld [vmem:[%s19 + $0x184] sm:$0xf]
        %v2348 = vld [vmem:[%s19 + $0x188] sm:$0xff]
        %v2349 = vld [vmem:[%s19 + $0x190] sm:$0xff]
        %v2350 = vld [vmem:[%s19 + $0x198] sm:$0xff]
        %v2351 = vld [vmem:[%s19 + $0x1a0] sm:$0xf]
        %v2352 = vld [vmem:[%s19 + $0x1a4] sm:$0xff]
        %v2353 = vld [vmem:[%s19 + $0x1ac] sm:$0xff]
        %v2354 = vld [vmem:[%s19 + $0x1b4] sm:$0xff]
        %v2355 = vld [vmem:[%s19 + $0x1bc] sm:$0xf]
        %v2356 = vld [vmem:[%s19 + $0x1c0] sm:$0xff]
        %v2357 = vld [vmem:[%s19 + $0x1c8] sm:$0xff]
        %v2358 = vld [vmem:[%s19 + $0x1d0] sm:$0xff]
        %v2359 = vld [vmem:[%s19 + $0x1d8] sm:$0xf]
        %v2360 = vld [vmem:[%s19 + $0x1dc] sm:$0xff]
        %v2361 = vld [vmem:[%s19 + $0x1e4] sm:$0xff]
        %v2362 = vld [vmem:[%s19 + $0x1ec] sm:$0xff]
        %v2363 = vld [vmem:[%s19 + $0x1f4] sm:$0xf]
        %v2364 = vld [vmem:[%s19 + $0x1f8] sm:$0xff]
        %v2365 = vld [vmem:[%s19 + $0x200] sm:$0xff]
        %v2366 = vld [vmem:[%s19 + $0x208] sm:$0xff]
        %v2367 = vld [vmem:[%s19 + $0x210] sm:$0xf]
        %v2368 = vld [vmem:[%s19 + $0x214] sm:$0xff]
        %v2369 = vld [vmem:[%s19 + $0x21c] sm:$0xff]
        %v2370 = vld [vmem:[%s19 + $0x224] sm:$0xff]
        %v2371 = vld [vmem:[%s19 + $0x22c] sm:$0xf]
        %v2372 = vld [vmem:[%s19 + $0x230] sm:$0xff]
        %v2373 = vld [vmem:[%s19 + $0x238] sm:$0xff]
        %v2374 = vld [vmem:[%s19 + $0x240] sm:$0xff]
        %v2375 = vld [vmem:[%s19 + $0x248] sm:$0xf]
        %v2376 = vld [vmem:[%s19 + $0x24c] sm:$0xff]
        %v2377 = vld [vmem:[%s19 + $0x254] sm:$0xff]
        %v2378 = vld [vmem:[%s19 + $0x25c] sm:$0xff]
        %v2379 = vld [vmem:[%s19 + $0x264] sm:$0xf]
        %v2380 = vld [vmem:[%s19 + $0x268] sm:$0xff]
        %v2381 = vld [vmem:[%s19 + $0x270] sm:$0xff]
        %v2382 = vld [vmem:[%s19 + $0x278] sm:$0xff]
        %v2383 = vld [vmem:[%s19 + $0x280] sm:$0xf]
        %v2384 = vld [vmem:[%s19 + $0x284] sm:$0xff]
        %v2385 = vld [vmem:[%s19 + $0x28c] sm:$0xff]
        %v2386 = vld [vmem:[%s19 + $0x294] sm:$0xff]
        %v2387 = vld [vmem:[%s19 + $0x29c] sm:$0xf]
        %v2388 = vld [vmem:[%s19 + $0x2a0] sm:$0xff]
        %v2389 = vld [vmem:[%s19 + $0x2a8] sm:$0xff]
        %v2390 = vld [vmem:[%s19 + $0x2b0] sm:$0xff]
        %v2391 = vld [vmem:[%s19 + $0x2b8] sm:$0xf]
        %v2392 = vld [vmem:[%s19 + $0x2bc] sm:$0xff]
        %v2393 = vld [vmem:[%s19 + $0x2c4] sm:$0xff]
        %v2394 = vld [vmem:[%s19 + $0x2cc] sm:$0xff]
        %v2395 = vld [vmem:[%s19 + $0x2d4] sm:$0xf]
        %v2396 = vld [vmem:[%s19 + $0x2d8] sm:$0xff]
        %v2397 = vld [vmem:[%s19 + $0x2e0] sm:$0xff]
        %v2398 = vld [vmem:[%s19 + $0x2e8] sm:$0xff]
        %v2399 = vld [vmem:[%s19 + $0x2f0] sm:$0xf]
        %v2400 = vld [vmem:[%s19 + $0x2f4] sm:$0xff]
        %v2401 = vld [vmem:[%s19 + $0x2fc] sm:$0xff]
        %v2402 = vld [vmem:[%s19 + $0x304] sm:$0xff]
        %v2403 = vld [vmem:[%s19 + $0x30c] sm:$0xf]
        %v2404 = vld [vmem:[%s19 + $0x310] sm:$0xff]
        %v2405 = vld [vmem:[%s19 + $0x318] sm:$0xff]
        %v2406 = vld [vmem:[%s19 + $0x320] sm:$0xff]
        %v2407 = vld [vmem:[%s19 + $0x328] sm:$0xf]
        %v2408 = vld [vmem:[%s19 + $0x32c] sm:$0xff]
        %v2409 = vld [vmem:[%s19 + $0x334] sm:$0xff]
        %v2410 = vld [vmem:[%s19 + $0x33c] sm:$0xff]
        %v2411 = vld [vmem:[%s19 + $0x344] sm:$0xf]
        %v2412 = vld [vmem:[%s19 + $0x348] sm:$0xff]
        %v2413 = vld [vmem:[%s19 + $0x350] sm:$0xff]
        %v2414 = vld [vmem:[%s19 + $0x358] sm:$0xff]
        %v2415 = vld [vmem:[%s19 + $0x360] sm:$0xf]
        %v2416 = vld [vmem:[%s19 + $0x364] sm:$0xff]
        %v2417 = vld [vmem:[%s19 + $0x36c] sm:$0xff]
        %v2418 = vld [vmem:[%s19 + $0x374] sm:$0xff]
        %v2419 = vld [vmem:[%s19 + $0x37c] sm:$0xf]
        %v2420 = vld [vmem:[%s20] sm:$0x7f]
        %v2422 = vlaneseq
        %v2423 = vshrl.u32 %v2422, 7
        %v2424 = vsub.s32 0, %v2423
        %v2425 = vrot.slane %v2420, %v2424
        %v2426 = vlaneseq
        %v2427 = vshrl.u32 %v2426, 7
        %v2428 = vsub.s32 1, %v2427
        %v2429 = vrot.slane %v2420, %v2428
        %v2430 = vlaneseq
        %v2431 = vshrl.u32 %v2430, 7
        %v2432 = vsub.s32 2, %v2431
        %v2433 = vrot.slane %v2420, %v2432
        %v2434 = vlaneseq
        %v2435 = vshrl.u32 %v2434, 7
        %v2436 = vsub.s32 3, %v2435
        %v2437 = vrot.slane %v2420, %v2436
        %v2438 = vlaneseq
        %v2439 = vshrl.u32 %v2438, 7
        %v2440 = vsub.s32 4, %v2439
        %v2441 = vrot.slane %v2420, %v2440
        %v2442 = vlaneseq
        %v2443 = vshrl.u32 %v2442, 7
        %v2444 = vsub.s32 5, %v2443
        %v2445 = vrot.slane %v2420, %v2444
        %v2446 = vlaneseq
        %v2447 = vshrl.u32 %v2446, 7
        %v2448 = vsub.s32 6, %v2447
        %v2449 = vrot.slane %v2420, %v2448
        %v2585 = vunpack.c.l.b16 %v2292
        %v2586 = vunpack.c.h.b16 %v2292
        %v2587 = vunpack.c.l.b16 %v2293
        %v2588 = vunpack.c.h.b16 %v2293
        %v2589 = vunpack.c.l.b16 %v2294
        %v2590 = vunpack.c.h.b16 %v2294
        %v2591 = vunpack.c.l.b16 %v2295
        %v2592 = vunpack.c.l.b16 %v2296
        %v2593 = vunpack.c.h.b16 %v2296
        %v2594 = vunpack.c.l.b16 %v2297
        %v2595 = vunpack.c.h.b16 %v2297
        %v2596 = vunpack.c.l.b16 %v2298
        %v2597 = vunpack.c.h.b16 %v2298
        %v2598 = vunpack.c.l.b16 %v2299
        %v2599 = vunpack.c.l.b16 %v2300
        %v2600 = vunpack.c.h.b16 %v2300
        %v2601 = vunpack.c.l.b16 %v2301
        %v2602 = vunpack.c.h.b16 %v2301
        %v2603 = vunpack.c.l.b16 %v2302
        %v2604 = vunpack.c.h.b16 %v2302
        %v2605 = vunpack.c.l.b16 %v2303
        %v2606 = vunpack.c.l.b16 %v2304
        %v2607 = vunpack.c.h.b16 %v2304
        %v2608 = vunpack.c.l.b16 %v2305
        %v2609 = vunpack.c.h.b16 %v2305
        %v2610 = vunpack.c.l.b16 %v2306
        %v2611 = vunpack.c.h.b16 %v2306
        %v2612 = vunpack.c.l.b16 %v2307
        %v2613 = vunpack.c.l.b16 %v2308
        %v2614 = vunpack.c.h.b16 %v2308
        %v2615 = vunpack.c.l.b16 %v2309
        %v2616 = vunpack.c.h.b16 %v2309
        %v2617 = vunpack.c.l.b16 %v2310
        %v2618 = vunpack.c.h.b16 %v2310
        %v2619 = vunpack.c.l.b16 %v2311
        %v2620 = vunpack.c.l.b16 %v2312
        %v2621 = vunpack.c.h.b16 %v2312
        %v2622 = vunpack.c.l.b16 %v2313
        %v2623 = vunpack.c.h.b16 %v2313
        %v2624 = vunpack.c.l.b16 %v2314
        %v2625 = vunpack.c.h.b16 %v2314
        %v2626 = vunpack.c.l.b16 %v2315
        %v2627 = vunpack.c.l.b16 %v2316
        %v2628 = vunpack.c.h.b16 %v2316
        %v2629 = vunpack.c.l.b16 %v2317
        %v2630 = vunpack.c.h.b16 %v2317
        %v2631 = vunpack.c.l.b16 %v2318
        %v2632 = vunpack.c.h.b16 %v2318
        %v2633 = vunpack.c.l.b16 %v2319
        %v2634 = vunpack.c.l.b16 %v2320
        %v2635 = vunpack.c.h.b16 %v2320
        %v2636 = vunpack.c.l.b16 %v2321
        %v2637 = vunpack.c.h.b16 %v2321
        %v2638 = vunpack.c.l.b16 %v2322
        %v2639 = vunpack.c.h.b16 %v2322
        %v2640 = vunpack.c.l.b16 %v2323
        %v2641 = vunpack.c.l.b16 %v2324
        %v2642 = vunpack.c.h.b16 %v2324
        %v2643 = vunpack.c.l.b16 %v2325
        %v2644 = vunpack.c.h.b16 %v2325
        %v2645 = vunpack.c.l.b16 %v2326
        %v2646 = vunpack.c.h.b16 %v2326
        %v2647 = vunpack.c.l.b16 %v2327
        %v2648 = vunpack.c.l.b16 %v2328
        %v2649 = vunpack.c.h.b16 %v2328
        %v2650 = vunpack.c.l.b16 %v2329
        %v2651 = vunpack.c.h.b16 %v2329
        %v2652 = vunpack.c.l.b16 %v2330
        %v2653 = vunpack.c.h.b16 %v2330
        %v2654 = vunpack.c.l.b16 %v2331
        %v2655 = vunpack.c.l.b16 %v2332
        %v2656 = vunpack.c.h.b16 %v2332
        %v2657 = vunpack.c.l.b16 %v2333
        %v2658 = vunpack.c.h.b16 %v2333
        %v2659 = vunpack.c.l.b16 %v2334
        %v2660 = vunpack.c.h.b16 %v2334
        %v2661 = vunpack.c.l.b16 %v2335
        %v2662 = vunpack.c.l.b16 %v2336
        %v2663 = vunpack.c.h.b16 %v2336
        %v2664 = vunpack.c.l.b16 %v2337
        %v2665 = vunpack.c.h.b16 %v2337
        %v2666 = vunpack.c.l.b16 %v2338
        %v2667 = vunpack.c.h.b16 %v2338
        %v2668 = vunpack.c.l.b16 %v2339
        %v2669 = vunpack.c.l.b16 %v2340
        %v2670 = vunpack.c.h.b16 %v2340
        %v2671 = vunpack.c.l.b16 %v2341
        %v2672 = vunpack.c.h.b16 %v2341
        %v2673 = vunpack.c.l.b16 %v2342
        %v2674 = vunpack.c.h.b16 %v2342
        %v2675 = vunpack.c.l.b16 %v2343
        %v2676 = vunpack.c.l.b16 %v2344
        %v2677 = vunpack.c.h.b16 %v2344
        %v2678 = vunpack.c.l.b16 %v2345
        %v2679 = vunpack.c.h.b16 %v2345
        %v2680 = vunpack.c.l.b16 %v2346
        %v2681 = vunpack.c.h.b16 %v2346
        %v2682 = vunpack.c.l.b16 %v2347
        %v2683 = vunpack.c.l.b16 %v2348
        %v2684 = vunpack.c.h.b16 %v2348
        %v2685 = vunpack.c.l.b16 %v2349
        %v2686 = vunpack.c.h.b16 %v2349
        %v2687 = vunpack.c.l.b16 %v2350
        %v2688 = vunpack.c.h.b16 %v2350
        %v2689 = vunpack.c.l.b16 %v2351
        %v2690 = vunpack.c.l.b16 %v2352
        %v2691 = vunpack.c.h.b16 %v2352
        %v2692 = vunpack.c.l.b16 %v2353
        %v2693 = vunpack.c.h.b16 %v2353
        %v2694 = vunpack.c.l.b16 %v2354
        %v2695 = vunpack.c.h.b16 %v2354
        %v2696 = vunpack.c.l.b16 %v2355
        %v2697 = vunpack.c.l.b16 %v2356
        %v2698 = vunpack.c.h.b16 %v2356
        %v2699 = vunpack.c.l.b16 %v2357
        %v2700 = vunpack.c.h.b16 %v2357
        %v2701 = vunpack.c.l.b16 %v2358
        %v2702 = vunpack.c.h.b16 %v2358
        %v2703 = vunpack.c.l.b16 %v2359
        %v2704 = vunpack.c.l.b16 %v2360
        %v2705 = vunpack.c.h.b16 %v2360
        %v2706 = vunpack.c.l.b16 %v2361
        %v2707 = vunpack.c.h.b16 %v2361
        %v2708 = vunpack.c.l.b16 %v2362
        %v2709 = vunpack.c.h.b16 %v2362
        %v2710 = vunpack.c.l.b16 %v2363
        %v2711 = vunpack.c.l.b16 %v2364
        %v2712 = vunpack.c.h.b16 %v2364
        %v2713 = vunpack.c.l.b16 %v2365
        %v2714 = vunpack.c.h.b16 %v2365
        %v2715 = vunpack.c.l.b16 %v2366
        %v2716 = vunpack.c.h.b16 %v2366
        %v2717 = vunpack.c.l.b16 %v2367
        %v2718 = vunpack.c.l.b16 %v2368
        %v2719 = vunpack.c.h.b16 %v2368
        %v2720 = vunpack.c.l.b16 %v2369
        %v2721 = vunpack.c.h.b16 %v2369
        %v2722 = vunpack.c.l.b16 %v2370
        %v2723 = vunpack.c.h.b16 %v2370
        %v2724 = vunpack.c.l.b16 %v2371
        %v2725 = vunpack.c.l.b16 %v2372
        %v2726 = vunpack.c.h.b16 %v2372
        %v2727 = vunpack.c.l.b16 %v2373
        %v2728 = vunpack.c.h.b16 %v2373
        %v2729 = vunpack.c.l.b16 %v2374
        %v2730 = vunpack.c.h.b16 %v2374
        %v2731 = vunpack.c.l.b16 %v2375
        %v2732 = vunpack.c.l.b16 %v2376
        %v2733 = vunpack.c.h.b16 %v2376
        %v2734 = vunpack.c.l.b16 %v2377
        %v2735 = vunpack.c.h.b16 %v2377
        %v2736 = vunpack.c.l.b16 %v2378
        %v2737 = vunpack.c.h.b16 %v2378
        %v2738 = vunpack.c.l.b16 %v2379
        %v2739 = vunpack.c.l.b16 %v2380
        %v2740 = vunpack.c.h.b16 %v2380
        %v2741 = vunpack.c.l.b16 %v2381
        %v2742 = vunpack.c.h.b16 %v2381
        %v2743 = vunpack.c.l.b16 %v2382
        %v2744 = vunpack.c.h.b16 %v2382
        %v2745 = vunpack.c.l.b16 %v2383
        %v2746 = vunpack.c.l.b16 %v2384
        %v2747 = vunpack.c.h.b16 %v2384
        %v2748 = vunpack.c.l.b16 %v2385
        %v2749 = vunpack.c.h.b16 %v2385
        %v2750 = vunpack.c.l.b16 %v2386
        %v2751 = vunpack.c.h.b16 %v2386
        %v2752 = vunpack.c.l.b16 %v2387
        %v2753 = vunpack.c.l.b16 %v2388
        %v2754 = vunpack.c.h.b16 %v2388
        %v2755 = vunpack.c.l.b16 %v2389
        %v2756 = vunpack.c.h.b16 %v2389
        %v2757 = vunpack.c.l.b16 %v2390
        %v2758 = vunpack.c.h.b16 %v2390
        %v2759 = vunpack.c.l.b16 %v2391
        %v2760 = vunpack.c.l.b16 %v2392
        %v2761 = vunpack.c.h.b16 %v2392
        %v2762 = vunpack.c.l.b16 %v2393
        %v2763 = vunpack.c.h.b16 %v2393
        %v2764 = vunpack.c.l.b16 %v2394
        %v2765 = vunpack.c.h.b16 %v2394
        %v2766 = vunpack.c.l.b16 %v2395
        %v2767 = vunpack.c.l.b16 %v2396
        %v2768 = vunpack.c.h.b16 %v2396
        %v2769 = vunpack.c.l.b16 %v2397
        %v2770 = vunpack.c.h.b16 %v2397
        %v2771 = vunpack.c.l.b16 %v2398
        %v2772 = vunpack.c.h.b16 %v2398
        %v2773 = vunpack.c.l.b16 %v2399
        %v2774 = vunpack.c.l.b16 %v2400
        %v2775 = vunpack.c.h.b16 %v2400
        %v2776 = vunpack.c.l.b16 %v2401
        %v2777 = vunpack.c.h.b16 %v2401
        %v2778 = vunpack.c.l.b16 %v2402
        %v2779 = vunpack.c.h.b16 %v2402
        %v2780 = vunpack.c.l.b16 %v2403
        %v2781 = vunpack.c.l.b16 %v2404
        %v2782 = vunpack.c.h.b16 %v2404
        %v2783 = vunpack.c.l.b16 %v2405
        %v2784 = vunpack.c.h.b16 %v2405
        %v2785 = vunpack.c.l.b16 %v2406
        %v2786 = vunpack.c.h.b16 %v2406
        %v2787 = vunpack.c.l.b16 %v2407
        %v2788 = vunpack.c.l.b16 %v2408
        %v2789 = vunpack.c.h.b16 %v2408
        %v2790 = vunpack.c.l.b16 %v2409
        %v2791 = vunpack.c.h.b16 %v2409
        %v2792 = vunpack.c.l.b16 %v2410
        %v2793 = vunpack.c.h.b16 %v2410
        %v2794 = vunpack.c.l.b16 %v2411
        %v2795 = vunpack.c.l.b16 %v2412
        %v2796 = vunpack.c.h.b16 %v2412
        %v2797 = vunpack.c.l.b16 %v2413
        %v2798 = vunpack.c.h.b16 %v2413
        %v2799 = vunpack.c.l.b16 %v2414
        %v2800 = vunpack.c.h.b16 %v2414
        %v2801 = vunpack.c.l.b16 %v2415
        %v2802 = vunpack.c.l.b16 %v2416
        %v2803 = vunpack.c.h.b16 %v2416
        %v2804 = vunpack.c.l.b16 %v2417
        %v2805 = vunpack.c.h.b16 %v2417
        %v2806 = vunpack.c.l.b16 %v2418
        %v2807 = vunpack.c.h.b16 %v2418
        %v2808 = vunpack.c.l.b16 %v2419
        %v2809 = vpack.c.b16 %v2592, %v2585
        %v2810 = vpack.c.b16 %v2593, %v2586
        %v2811 = vpack.c.b16 %v2594, %v2587
        %v2812 = vpack.c.b16 %v2595, %v2588
        %v2813 = vpack.c.b16 %v2596, %v2589
        %v2814 = vpack.c.b16 %v2597, %v2590
        %v2815 = vpack.c.b16 %v2598, %v2591
        %v2816 = vpack.c.b16 %v2606, %v2599
        %v2817 = vpack.c.b16 %v2607, %v2600
        %v2818 = vpack.c.b16 %v2608, %v2601
        %v2819 = vpack.c.b16 %v2609, %v2602
        %v2820 = vpack.c.b16 %v2610, %v2603
        %v2821 = vpack.c.b16 %v2611, %v2604
        %v2822 = vpack.c.b16 %v2612, %v2605
        %v2823 = vpack.c.b16 %v2620, %v2613
        %v2824 = vpack.c.b16 %v2621, %v2614
        %v2825 = vpack.c.b16 %v2622, %v2615
        %v2826 = vpack.c.b16 %v2623, %v2616
        %v2827 = vpack.c.b16 %v2624, %v2617
        %v2828 = vpack.c.b16 %v2625, %v2618
        %v2829 = vpack.c.b16 %v2626, %v2619
        %v2830 = vpack.c.b16 %v2634, %v2627
        %v2831 = vpack.c.b16 %v2635, %v2628
        %v2832 = vpack.c.b16 %v2636, %v2629
        %v2833 = vpack.c.b16 %v2637, %v2630
        %v2834 = vpack.c.b16 %v2638, %v2631
        %v2835 = vpack.c.b16 %v2639, %v2632
        %v2836 = vpack.c.b16 %v2640, %v2633
        %v2837 = vpack.c.b16 %v2648, %v2641
        %v2838 = vpack.c.b16 %v2649, %v2642
        %v2839 = vpack.c.b16 %v2650, %v2643
        %v2840 = vpack.c.b16 %v2651, %v2644
        %v2841 = vpack.c.b16 %v2652, %v2645
        %v2842 = vpack.c.b16 %v2653, %v2646
        %v2843 = vpack.c.b16 %v2654, %v2647
        %v2844 = vpack.c.b16 %v2662, %v2655
        %v2845 = vpack.c.b16 %v2663, %v2656
        %v2846 = vpack.c.b16 %v2664, %v2657
        %v2847 = vpack.c.b16 %v2665, %v2658
        %v2848 = vpack.c.b16 %v2666, %v2659
        %v2849 = vpack.c.b16 %v2667, %v2660
        %v2850 = vpack.c.b16 %v2668, %v2661
        %v2851 = vpack.c.b16 %v2676, %v2669
        %v2852 = vpack.c.b16 %v2677, %v2670
        %v2853 = vpack.c.b16 %v2678, %v2671
        %v2854 = vpack.c.b16 %v2679, %v2672
        %v2855 = vpack.c.b16 %v2680, %v2673
        %v2856 = vpack.c.b16 %v2681, %v2674
        %v2857 = vpack.c.b16 %v2682, %v2675
        %v2858 = vpack.c.b16 %v2690, %v2683
        %v2859 = vpack.c.b16 %v2691, %v2684
        %v2860 = vpack.c.b16 %v2692, %v2685
        %v2861 = vpack.c.b16 %v2693, %v2686
        %v2862 = vpack.c.b16 %v2694, %v2687
        %v2863 = vpack.c.b16 %v2695, %v2688
        %v2864 = vpack.c.b16 %v2696, %v2689
        %v2865 = vpack.c.b16 %v2704, %v2697
        %v2866 = vpack.c.b16 %v2705, %v2698
        %v2867 = vpack.c.b16 %v2706, %v2699
        %v2868 = vpack.c.b16 %v2707, %v2700
        %v2869 = vpack.c.b16 %v2708, %v2701
        %v2870 = vpack.c.b16 %v2709, %v2702
        %v2871 = vpack.c.b16 %v2710, %v2703
        %v2872 = vpack.c.b16 %v2718, %v2711
        %v2873 = vpack.c.b16 %v2719, %v2712
        %v2874 = vpack.c.b16 %v2720, %v2713
        %v2875 = vpack.c.b16 %v2721, %v2714
        %v2876 = vpack.c.b16 %v2722, %v2715
        %v2877 = vpack.c.b16 %v2723, %v2716
        %v2878 = vpack.c.b16 %v2724, %v2717
        %v2879 = vpack.c.b16 %v2732, %v2725
        %v2880 = vpack.c.b16 %v2733, %v2726
        %v2881 = vpack.c.b16 %v2734, %v2727
        %v2882 = vpack.c.b16 %v2735, %v2728
        %v2883 = vpack.c.b16 %v2736, %v2729
        %v2884 = vpack.c.b16 %v2737, %v2730
        %v2885 = vpack.c.b16 %v2738, %v2731
        %v2886 = vpack.c.b16 %v2746, %v2739
        %v2887 = vpack.c.b16 %v2747, %v2740
        %v2888 = vpack.c.b16 %v2748, %v2741
        %v2889 = vpack.c.b16 %v2749, %v2742
        %v2890 = vpack.c.b16 %v2750, %v2743
        %v2891 = vpack.c.b16 %v2751, %v2744
        %v2892 = vpack.c.b16 %v2752, %v2745
        %v2893 = vpack.c.b16 %v2760, %v2753
        %v2894 = vpack.c.b16 %v2761, %v2754
        %v2895 = vpack.c.b16 %v2762, %v2755
        %v2896 = vpack.c.b16 %v2763, %v2756
        %v2897 = vpack.c.b16 %v2764, %v2757
        %v2898 = vpack.c.b16 %v2765, %v2758
        %v2899 = vpack.c.b16 %v2766, %v2759
        %v2900 = vpack.c.b16 %v2774, %v2767
        %v2901 = vpack.c.b16 %v2775, %v2768
        %v2902 = vpack.c.b16 %v2776, %v2769
        %v2903 = vpack.c.b16 %v2777, %v2770
        %v2904 = vpack.c.b16 %v2778, %v2771
        %v2905 = vpack.c.b16 %v2779, %v2772
        %v2906 = vpack.c.b16 %v2780, %v2773
        %v2907 = vpack.c.b16 %v2788, %v2781
        %v2908 = vpack.c.b16 %v2789, %v2782
        %v2909 = vpack.c.b16 %v2790, %v2783
        %v2910 = vpack.c.b16 %v2791, %v2784
        %v2911 = vpack.c.b16 %v2792, %v2785
        %v2912 = vpack.c.b16 %v2793, %v2786
        %v2913 = vpack.c.b16 %v2794, %v2787
        %v2914 = vpack.c.b16 %v2802, %v2795
        %v2915 = vpack.c.b16 %v2803, %v2796
        %v2916 = vpack.c.b16 %v2804, %v2797
        %v2917 = vpack.c.b16 %v2805, %v2798
        %v2918 = vpack.c.b16 %v2806, %v2799
        %v2919 = vpack.c.b16 %v2807, %v2800
        %v2920 = vpack.c.b16 %v2808, %v2801
        %3033 = vmatprep.subr.bf16.mxu0 %v2859
        %3034 = vmatpush1.bf16.msra.mxu0 %v2858
        %3035 = vmatprep.subr.bf16.mxu0 %v2852
        %3036 = vmatpush1.bf16.msra.mxu0 %v2851
        %3037 = vmatprep.subr.bf16.mxu0 %v2845
        %3038 = vmatpush1.bf16.msra.mxu0 %v2844
        %3039 = vmatprep.subr.bf16.mxu0 %v2838
        %3040 = vmatpush1.bf16.msra.mxu0 %v2837
        %3041 = vmatprep.subr.bf16.mxu0 %v2831
        %3042 = vmatpush1.bf16.msra.mxu0 %v2830
        %3043 = vmatprep.subr.bf16.mxu0 %v2824
        %3044 = vmatpush1.bf16.msra.mxu0 %v2823
        %3045 = vmatprep.subr.bf16.mxu0 %v2817
        %3046 = vmatpush1.bf16.msra.mxu0 %v2816
        %3047 = vmatprep.subr.bf16.mxu0 %v2810
        %3048 = vmatpush1.bf16.msra.mxu0 %v2809
        %3049 = vmatprep.subr.bf16.mxu0 %v2915
        %3050 = vmatpush2.bf16.msra.mxu0 %v2914
        %3051 = vmatprep.subr.bf16.mxu0 %v2908
        %3052 = vmatpush2.bf16.msra.mxu0 %v2907
        %3053 = vmatprep.subr.bf16.mxu0 %v2901
        %3054 = vmatpush2.bf16.msra.mxu0 %v2900
        %3055 = vmatprep.subr.bf16.mxu0 %v2894
        %3056 = vmatpush2.bf16.msra.mxu0 %v2893
        %3057 = vmatprep.subr.bf16.mxu0 %v2887
        %3058 = vmatpush2.bf16.msra.mxu0 %v2886
        %3059 = vmatprep.subr.bf16.mxu0 %v2880
        %3060 = vmatpush2.bf16.msra.mxu0 %v2879
        %3061 = vmatprep.subr.bf16.mxu0 %v2873
        %3062 = vmatpush2.bf16.msra.mxu0 %v2872
        %3063 = vmatprep.subr.bf16.mxu0 %v2866
        %3064 = vmatpush2.bf16.msra.mxu0 %v2865
        %3065 = vmatprep.mubr.bf16.mxu0 %v2291
        %3066 = vmatmul.mubr.bf16.gmra.mxu0 %v2290
        %v3067 = vpop.f32.mrf.mxu0
        %v3068 = vadd.f32 %v2425, %v3067
        %v3069 = vpop.f32.mrf.mxu0
        %v3070 = vadd.f32 %v2429, %v3069
        %v3071 = vpop.f32.mrf.mxu0
        %v3072 = vadd.f32 %v2425, %v3071
        %v3073 = vpop.f32.mrf.mxu0
        %v3074 = vadd.f32 %v2429, %v3073
        %3075 = vdwg.mxu0
        %3076 = vmatprep.subr.bf16.mxu0 %v2861
        %3077 = vmatpush1.bf16.msra.mxu0 %v2860
        %3078 = vmatprep.subr.bf16.mxu0 %v2854
        %3079 = vmatpush1.bf16.msra.mxu0 %v2853
        %3080 = vmatprep.subr.bf16.mxu0 %v2847
        %3081 = vmatpush1.bf16.msra.mxu0 %v2846
        %3082 = vmatprep.subr.bf16.mxu0 %v2840
        %3083 = vmatpush1.bf16.msra.mxu0 %v2839
        %3084 = vmatprep.subr.bf16.mxu0 %v2833
        %3085 = vmatpush1.bf16.msra.mxu0 %v2832
        %3086 = vmatprep.subr.bf16.mxu0 %v2826
        %3087 = vmatpush1.bf16.msra.mxu0 %v2825
        %3088 = vmatprep.subr.bf16.mxu0 %v2819
        %3089 = vmatpush1.bf16.msra.mxu0 %v2818
        %3090 = vmatprep.subr.bf16.mxu0 %v2812
        %3091 = vmatpush1.bf16.msra.mxu0 %v2811
        %3092 = vmatprep.subr.bf16.mxu0 %v2917
        %3093 = vmatpush2.bf16.msra.mxu0 %v2916
        %3094 = vmatprep.subr.bf16.mxu0 %v2910
        %3095 = vmatpush2.bf16.msra.mxu0 %v2909
        %3096 = vmatprep.subr.bf16.mxu0 %v2903
        %3097 = vmatpush2.bf16.msra.mxu0 %v2902
        %3098 = vmatprep.subr.bf16.mxu0 %v2896
        %3099 = vmatpush2.bf16.msra.mxu0 %v2895
        %3100 = vmatprep.subr.bf16.mxu0 %v2889
        %3101 = vmatpush2.bf16.msra.mxu0 %v2888
        %3102 = vmatprep.subr.bf16.mxu0 %v2882
        %3103 = vmatpush2.bf16.msra.mxu0 %v2881
        %3104 = vmatprep.subr.bf16.mxu0 %v2875
        %3105 = vmatpush2.bf16.msra.mxu0 %v2874
        %3106 = vmatprep.subr.bf16.mxu0 %v2868
        %3107 = vmatpush2.bf16.msra.mxu0 %v2867
        %3108 = vmatprep.mubr.bf16.mxu0 %v2291
        %3109 = vmatmul.mubr.bf16.gmra.mxu0 %v2290
        %v3110 = vpop.f32.mrf.mxu0
        %v3111 = vadd.f32 %v2433, %v3110
        %v3112 = vpop.f32.mrf.mxu0
        %v3113 = vadd.f32 %v2437, %v3112
        %v3114 = vpop.f32.mrf.mxu0
        %v3115 = vadd.f32 %v2433, %v3114
        %v3116 = vpop.f32.mrf.mxu0
        %v3117 = vadd.f32 %v2437, %v3116
        %3118 = vdwg.mxu0
        %3119 = vmatprep.subr.bf16.mxu0 %v2863
        %3120 = vmatpush1.bf16.msra.mxu0 %v2862
        %3121 = vmatprep.subr.bf16.mxu0 %v2856
        %3122 = vmatpush1.bf16.msra.mxu0 %v2855
        %3123 = vmatprep.subr.bf16.mxu0 %v2849
        %3124 = vmatpush1.bf16.msra.mxu0 %v2848
        %3125 = vmatprep.subr.bf16.mxu0 %v2842
        %3126 = vmatpush1.bf16.msra.mxu0 %v2841
        %3127 = vmatprep.subr.bf16.mxu0 %v2835
        %3128 = vmatpush1.bf16.msra.mxu0 %v2834
        %3129 = vmatprep.subr.bf16.mxu0 %v2828
        %3130 = vmatpush1.bf16.msra.mxu0 %v2827
        %3131 = vmatprep.subr.bf16.mxu0 %v2821
        %3132 = vmatpush1.bf16.msra.mxu0 %v2820
        %3133 = vmatprep.subr.bf16.mxu0 %v2814
        %3134 = vmatpush1.bf16.msra.mxu0 %v2813
        %3135 = vmatprep.subr.bf16.mxu0 %v2919
        %3136 = vmatpush2.bf16.msra.mxu0 %v2918
        %3137 = vmatprep.subr.bf16.mxu0 %v2912
        %3138 = vmatpush2.bf16.msra.mxu0 %v2911
        %3139 = vmatprep.subr.bf16.mxu0 %v2905
        %3140 = vmatpush2.bf16.msra.mxu0 %v2904
        %3141 = vmatprep.subr.bf16.mxu0 %v2898
        %3142 = vmatpush2.bf16.msra.mxu0 %v2897
        %3143 = vmatprep.subr.bf16.mxu0 %v2891
        %3144 = vmatpush2.bf16.msra.mxu0 %v2890
        %3145 = vmatprep.subr.bf16.mxu0 %v2884
        %3146 = vmatpush2.bf16.msra.mxu0 %v2883
        %3147 = vmatprep.subr.bf16.mxu0 %v2877
        %3148 = vmatpush2.bf16.msra.mxu0 %v2876
        %3149 = vmatprep.subr.bf16.mxu0 %v2870
        %3150 = vmatpush2.bf16.msra.mxu0 %v2869
        %3151 = vmatprep.mubr.bf16.mxu0 %v2291
        %3152 = vmatmul.mubr.bf16.gmra.mxu0 %v2290
        %v3153 = vpop.f32.mrf.mxu0
        %v3154 = vadd.f32 %v2441, %v3153
        %v3155 = vpop.f32.mrf.mxu0
        %v3156 = vadd.f32 %v2445, %v3155
        %v3157 = vpop.f32.mrf.mxu0
        %v3158 = vadd.f32 %v2441, %v3157
        %v3159 = vpop.f32.mrf.mxu0
        %v3160 = vadd.f32 %v2445, %v3159
        %3161 = vdwg.mxu0
        %3162 = vmatprep.subr.bf16.mxu0 0
        %3163 = vmatpush1.bf16.msra.mxu0 %v2864
        %3164 = vmatprep.subr.bf16.mxu0 0
        %3165 = vmatpush1.bf16.msra.mxu0 %v2857
        %3166 = vmatprep.subr.bf16.mxu0 0
        %3167 = vmatpush1.bf16.msra.mxu0 %v2850
        %3168 = vmatprep.subr.bf16.mxu0 0
        %3169 = vmatpush1.bf16.msra.mxu0 %v2843
        %3170 = vmatprep.subr.bf16.mxu0 0
        %3171 = vmatpush1.bf16.msra.mxu0 %v2836
        %3172 = vmatprep.subr.bf16.mxu0 0
        %3173 = vmatpush1.bf16.msra.mxu0 %v2829
        %3174 = vmatprep.subr.bf16.mxu0 0
        %3175 = vmatpush1.bf16.msra.mxu0 %v2822
        %3176 = vmatprep.subr.bf16.mxu0 0
        %3177 = vmatpush1.bf16.msra.mxu0 %v2815
        %3178 = vmatprep.subr.bf16.mxu0 0
        %3179 = vmatpush2.bf16.msra.mxu0 %v2920
        %3180 = vmatprep.subr.bf16.mxu0 0
        %3181 = vmatpush2.bf16.msra.mxu0 %v2913
        %3182 = vmatprep.subr.bf16.mxu0 0
        %3183 = vmatpush2.bf16.msra.mxu0 %v2906
        %3184 = vmatprep.subr.bf16.mxu0 0
        %3185 = vmatpush2.bf16.msra.mxu0 %v2899
        %3186 = vmatprep.subr.bf16.mxu0 0
        %3187 = vmatpush2.bf16.msra.mxu0 %v2892
        %3188 = vmatprep.subr.bf16.mxu0 0
        %3189 = vmatpush2.bf16.msra.mxu0 %v2885
        %3190 = vmatprep.subr.bf16.mxu0 0
        %3191 = vmatpush2.bf16.msra.mxu0 %v2878
        %3192 = vmatprep.subr.bf16.mxu0 0
        %3193 = vmatpush2.bf16.msra.mxu0 %v2871
        %3194 = vmatprep.mubr.bf16.mxu0 %v2291
        %3195 = vmatmul.mubr.bf16.gmra.mxu0 %v2290
        %v3196 = vpop.f32.mrf.mxu0
        %v3197 = vadd.f32 %v2449, %v3196
        %v3198 = vpop.f32.mrf.mxu0
        %v3199 = vpop.f32.mrf.mxu0
        %v3200 = vadd.f32 %v2449, %v3199
        %v3201 = vpop.f32.mrf.mxu0
        %3202 = vdwg.mxu0
        %v3203 = vmax.f32 %v3068, 0.0
        %v3204 = vmax.f32 %v3070, 0.0
        %v3205 = vmax.f32 %v3111, 0.0
        %v3206 = vmax.f32 %v3113, 0.0
        %v3207 = vmax.f32 %v3154, 0.0
        %v3208 = vmax.f32 %v3156, 0.0
        %v3209 = vmax.f32 %v3197, 0.0
        %v3210 = vmax.f32 %v3072, 0.0
        %v3211 = vmax.f32 %v3074, 0.0
        %v3212 = vmax.f32 %v3115, 0.0
        %v3213 = vmax.f32 %v3117, 0.0
        %v3214 = vmax.f32 %v3158, 0.0
        %v3215 = vmax.f32 %v3160, 0.0
        %v3216 = vmax.f32 %v3200, 0.0
        %3217 = vst [vmem:[%s652] sm:$0xff] %v3203
        %3218 = vst [vmem:[%s652 + $0x8] sm:$0xff] %v3204
        %3219 = vst [vmem:[%s652 + $0x10] sm:$0xff] %v3205
        %3220 = vst [vmem:[%s652 + $0x18] sm:$0xff] %v3206
        %3221 = vst [vmem:[%s652 + $0x20] sm:$0xff] %v3207
        %3222 = vst [vmem:[%s652 + $0x28] sm:$0xff] %v3208
        %3223 = vst.msk [vmem:[%s652 + $0x30] sm:$0xff] %vm1283, %v3209
        %3224 = vst [vmem:[%s652 + $0x38] sm:$0xff] %v3210
        %3225 = vst [vmem:[%s652 + $0x40] sm:$0xff] %v3211
        %3226 = vst [vmem:[%s652 + $0x48] sm:$0xff] %v3212
        %3227 = vst [vmem:[%s652 + $0x50] sm:$0xff] %v3213
        %3228 = vst [vmem:[%s652 + $0x58] sm:$0xff] %v3214
        %3229 = vst [vmem:[%s652 + $0x60] sm:$0xff] %v3215
        %3230 = vst.msk [vmem:[%s652 + $0x68] sm:$0xff] %vm1283, %v3216
        %s3231 = sand.u32 %s489, 1
        %s3232 = scalar_lea.sflag [#allocation3], %s3231
        %s3233 = sand.u32 %s489, 1
        %s3234 = smul.addr %s3233, 112
        %s3235 = scalar_lea.vmem [#allocation2], %s3234
        // Predicated region
        $region105: #{tpu_custom_call.1} parent=103 // pred_check
          %p3236 = pneg %p499
        $region106: #{tpu_custom_call.1} parent=103 // pred_check_branch
          %3238 = sbr.rel (%p3236) target = $region108
        $region107: #{tpu_custom_call.1} parent=103 // pred_region
          %s3239 = smul.u32 2, %s35
          %s3241 = ssub.s32 1792, 1792
          %3242 = vsyncadd %s3232, %s3241
          %s3243 = smul.addr %s3239, 7
          %s3244 = smul.addr %s3243, 128
          %s3245 = scalar_lea.hbm %s21, %s3244
          %s3246 = sshll.u32 %s3235, 4
          %s3247 = int_to_ptr.vmem [resolvable:$true] %s3246
          %3252 = dma.vmem_to_hbm [thread:$0]  %s3247, 1792, %s3245, %s3232, 896, 896, 56
        $region108: #{tpu_custom_call.1} parent=103 // pred_fallthru
          _
      $region104: #{tpu_custom_call.1} parent=5 // pred_fallthru
        _
      %p3253 = scmp.le.s32.totalorder 2, %s30
      // Predicated region
      $region109: #{tpu_custom_call.1} parent=5 // pred_check
        %p3254 = pneg %p3253
      $region110: #{tpu_custom_call.1} parent=5 // pred_check_branch
        %3256 = sbr.rel (%p3254) target = $region112
      $region111: #{tpu_custom_call.1} parent=5 // pred_region
        %s3257 = ssub.s32 %s30, 2
        // Predicated region
        $region113: #{tpu_custom_call.1} parent=111 // pred_check
          %p3258 = pneg %p505
        $region114: #{tpu_custom_call.1} parent=111 // pred_check_branch
          %3260 = sbr.rel (%p3258) target = $region116
        $region115: #{tpu_custom_call.1} parent=111 // pred_region
          %s3261 = sand.u32 %s490, 1
          %s3262 = scalar_lea.sflag [#allocation3], %s3261
          %s3263 = sand.u32 %s490, 1
          %s3264 = smul.addr %s3263, 112
          %s3265 = scalar_lea.vmem [#allocation2], %s3264
          %3266 = dma.done %s3262, 1792
        $region116: #{tpu_custom_call.1} parent=111 // pred_fallthru
          _
      $region112: #{tpu_custom_call.1} parent=5 // pred_fallthru
        _
    $region6: #{tpu_custom_call.1} parent=1 // loop_footer
      %s34 = sadd.s32 1, %s30
    $region7: #{tpu_custom_call.1} parent=1 // loop_footer_branch
      %29 = sbr.rel target = $region3
    $region8: #{tpu_custom_call.1} parent=1 // loop_exit
      _
    %3267 = vsyncpa [#allocation3], 1
    %s3268 = scalar_lea.sflag [#allocation3], 1
    %3269 = vsyncpa %s3268, 1

</llo_original>
